<compile_context>
chip_gen: v5e
topology: v5e:2x2
jax: 0.10.0
libtpu: 0.0.40
codegen_flags: <defaults>
</compile_context>

<pallas_src>
import functools

import jax
import jax.numpy as jnp
from jax.experimental import pallas as pl
from jax.experimental.pallas import tpu as pltpu


def factor_encoder_kernel(y_ref, e_ref, wp_ref, bp_ref, wmap_ref, bmap_ref,
                          out_ref, *, k, use_bf16_matmul):
    bt, ns, h = e_ref.shape
    m = wp_ref.shape[-1]
    two_k = out_ref.shape[-1]

    mm_dtype = jnp.bfloat16 if use_bf16_matmul else jnp.float32

    # --- portfolio_layer + softmax over M on the folded (BT*Ns, H) slab ---
    # NOTE: this reshape is a layout no-op only when Ns is a multiple of 8
    # (sublane count); other Ns values stay correct but materialize a copy.
    e_flat = e_ref[...].reshape(bt * ns, h)
    logits = jnp.dot(e_flat.astype(mm_dtype), wp_ref[...].astype(mm_dtype),
                     preferred_element_type=jnp.float32) + bp_ref[...]   # (BT*Ns, M)
    lmax = jnp.max(logits, axis=-1, keepdims=True)
    p = jnp.exp(logits - lmax)
    denom = jnp.sum(p, axis=-1, keepdims=True)
    ap = p * pl.reciprocal(denom, approx=False)                           # (BT*Ns, M)

    # --- yp[b, m] = sum_n y[b, n] * ap[b, n, m] ---
    # y_ref is (BT, Ns, 1): pure VPU lane-broadcast multiply + sublane reduce.
    ap3 = ap.reshape(bt, ns, m)
    yp = jnp.sum(y_ref[...] * ap3, axis=1)                                # (BT, M)

    # --- fused mapping linears: packed [mu | sigma_lin] in one matmul ---
    mapped = jnp.dot(yp.astype(mm_dtype), wmap_ref[...].astype(mm_dtype),
                     preferred_element_type=jnp.float32) + bmap_ref[...]  # (BT, 2K)

    # Single-exp stable softplus; applied to the sigma half via a lane mask
    # (same vregs either way, so the masked select is effectively free).
    sp = jnp.maximum(mapped, 0.0) + jnp.log1p(jnp.exp(-jnp.abs(mapped)))
    lane = jax.lax.broadcasted_iota(jnp.int32, (bt, two_k), 1)
    out_ref[...] = jnp.where(lane < k, mapped, sp)


def fuse_factor_encoder_params(wp, bp, wmu, bmu, wsig, bsig):
    """One-time parameter fusion (do this at setup, NOT per forward call)."""
    M = wp.shape[1]
    K = wmu.shape[1]
    wmap = jnp.concatenate([wmu, wsig], axis=1)          # (M, 2K)
    bmap = jnp.concatenate([bmu, bsig]).reshape(1, 2 * K)  # (1, 2K)
    bp2 = bp.reshape(1, M)                                # (1, M)
    return {"wp": wp, "bp2": bp2, "wmap": wmap, "bmap": bmap, "K": K}


def _pick_batch_tile(B, Ns):
    # Split into two grid steps only when each half carries enough portfolio
    # rows (>= ~2048) to amortize per-step overhead / weight re-DMA; at small
    # B (the spec's B=32) run a single grid step on every TPU generation.
    if B % 2 == 0 and (B // 2) * Ns >= 2048:
        return B // 2
    return B


def factor_encoder(y, e, fused, *, bt=None, use_bf16_matmul=False):
    B, Ns, H = e.shape
    wp, bp2, wmap, bmap, K = (fused["wp"], fused["bp2"], fused["wmap"],
                              fused["bmap"], fused["K"])
    M = wp.shape[1]

    if bt is None:
        bt = _pick_batch_tile(B, Ns)
    assert B % bt == 0, "batch tile must divide batch"
    grid = (B // bt,)

    # y as (B, Ns, 1): DMA delivers the broadcast-ready layout, no in-kernel
    # cross-lane relayout.
    y3 = y.reshape(B, Ns, 1)

    cost = pl.CostEstimate(
        flops=2 * B * Ns * H * M + 6 * B * Ns * M + 2 * B * M * 2 * K,
        transcendentals=B * Ns * M + B * Ns + 2 * B * 2 * K,
        bytes_accessed=4 * (y3.size + e.size + wp.size + bp2.size
                            + wmap.size + bmap.size + B * 2 * K),
    )

    # Scoped-VMEM guard: only relevant if bt is ever scaled way up
    # (e tile ~4*Ns*H*bt bytes, double buffered); default limits are
    # 16 MiB (v5e) / 32 MiB (v6e/v7x).
    tile_bytes = 2 * 4 * (bt * Ns * H + bt * Ns + bt * 2 * K)
    weight_bytes = 4 * (H * M + M + M * 2 * K + 2 * K)
    compiler_kwargs = {}
    if tile_bytes + weight_bytes > 12 * 1024 * 1024:
        compiler_kwargs["vmem_limit_bytes"] = min(
            2 * (tile_bytes + weight_bytes), 60 * 1024 * 1024)

    grid_spec = pltpu.PrefetchScalarGridSpec(
        num_scalar_prefetch=0,
        grid=grid,
        in_specs=[
            pl.BlockSpec((bt, Ns, 1), lambda b: (b, 0, 0)),   # y (broadcast-ready)
            pl.BlockSpec((bt, Ns, H), lambda b: (b, 0, 0)),   # e
            pl.BlockSpec((H, M), lambda b: (0, 0)),           # W_portfolio (resident)
            pl.BlockSpec((1, M), lambda b: (0, 0)),           # b_portfolio
            pl.BlockSpec((M, 2 * K), lambda b: (0, 0)),       # [W_mu | W_sigma]
            pl.BlockSpec((1, 2 * K), lambda b: (0, 0)),       # [b_mu | b_sigma]
        ],
        out_specs=pl.BlockSpec((bt, 2 * K), lambda b: (b, 0)),
    )

    packed = pl.pallas_call(
        functools.partial(factor_encoder_kernel, k=K,
                          use_bf16_matmul=use_bf16_matmul),
        out_shape=jax.ShapeDtypeStruct((B, 2 * K), jnp.float32),
        grid_spec=grid_spec,
        compiler_params=pltpu.CompilerParams(
            dimension_semantics=("parallel",), **compiler_kwargs),
        cost_estimate=cost,
    )(y3, e, wp, bp2, wmap, bmap)

    mu_post = packed[:, :K]
    sigma_post = packed[:, K:]
    return mu_post, sigma_post


def _init_linear(key, fan_in, fan_out):
    # PyTorch nn.Linear default init: U(-1/sqrt(fan_in), 1/sqrt(fan_in)).
    kw, kb = jax.random.split(key)
    bound = 1.0 / jnp.sqrt(fan_in)
    w = jax.random.uniform(kw, (fan_in, fan_out), jnp.float32, -bound, bound)
    b = jax.random.uniform(kb, (fan_out,), jnp.float32, -bound, bound)
    return w, b


def _reference(y, e, wp, bp, wmu, bmu, wsig, bsig):
    ap = jax.nn.softmax(jnp.einsum('bnh,hm->bnm', e, wp) + bp, axis=-1)
    yp = jnp.einsum('bn,bnm->bm', y, ap)
    mu = yp @ wmu + bmu
    sigma = jax.nn.softplus(yp @ wsig + bsig)
    return mu, sigma


if __name__ == "__main__":
    # batch_size=32 per the spec; H=25 (GRU hidden), M=30, K=25 as in the module.
    B, Ns, H, M, K = 32, 8, 25, 30, 25

    key = jax.random.PRNGKey(0)
    k_y, k_e, k_p, k_mu, k_sig = jax.random.split(key, 5)

    y = jax.random.normal(k_y, (B, Ns), jnp.float32)
    e = jax.random.normal(k_e, (B, Ns, H), jnp.float32)  # FeatureExtractor output

    wp, bp = _init_linear(k_p, H, M)        # portfolio_layer: Linear(25, 30)
    wmu, bmu = _init_linear(k_mu, M, K)     # mapping_layer_mu: Linear(30, 25)
    wsig, bsig = _init_linear(k_sig, M, K)  # mapping_layer_sigma: Linear(30, 25)

    # One-time parameter fusion (hoisted out of the forward path).
    fused = fuse_factor_encoder_params(wp, bp, wmu, bmu, wsig, bsig)
    jax.block_until_ready(fused)

    mu_post, sigma_post = factor_encoder(y, e, fused)
    jax.block_until_ready((mu_post, sigma_post))

    mu_ref, sigma_ref = _reference(y, e, wp, bp, wmu, bmu, wsig, bsig)
    assert mu_post.shape == (B, K) and sigma_post.shape == (B, K)
    assert jnp.allclose(mu_post, mu_ref, atol=1e-5, rtol=1e-5)
    assert jnp.allclose(sigma_post, sigma_ref, atol=1e-5, rtol=1e-5)

    print("KERNEL_OK")
</pallas_src>

<mosaic_0001>
module attributes {stable_mosaic.version = 11 : i64} {
  func.func @factor_encoder_kernel(%arg0: i32, %arg1: memref<32x8x1xf32, #tpu.memory_space<vmem>>, %arg2: memref<32x8x25xf32, #tpu.memory_space<vmem>>, %arg3: memref<25x30xf32, #tpu.memory_space<vmem>>, %arg4: memref<1x30xf32, #tpu.memory_space<vmem>>, %arg5: memref<30x50xf32, #tpu.memory_space<vmem>>, %arg6: memref<1x50xf32, #tpu.memory_space<vmem>>, %arg7: memref<32x50xf32, #tpu.memory_space<vmem>>) attributes {dimension_semantics = [#tpu.dimension_semantics<parallel>], iteration_bounds = array<i64: 1>, scalar_prefetch = 0 : i64, scratch_operands = 0 : i64, tpu.core_type = #tpu.core_type<tc>, window_params = [{transform_indices = @transform_0, window_bounds = array<i64: 32, 8, 1>}, {transform_indices = @transform_1, window_bounds = array<i64: 32, 8, 25>}, {pipeline_mode = #tpu.pipeline_mode<synchronous>, transform_indices = @transform_2, window_bounds = array<i64: 25, 30>}, {pipeline_mode = #tpu.pipeline_mode<synchronous>, transform_indices = @transform_3, window_bounds = array<i64: 1, 30>}, {pipeline_mode = #tpu.pipeline_mode<synchronous>, transform_indices = @transform_4, window_bounds = array<i64: 30, 50>}, {pipeline_mode = #tpu.pipeline_mode<synchronous>, transform_indices = @transform_5, window_bounds = array<i64: 1, 50>}, {transform_indices = @transform_6, window_bounds = array<i64: 32, 50>}]} {
    %c0 = arith.constant 0 : index
    %c0_0 = arith.constant 0 : index
    %c0_1 = arith.constant 0 : index
    %0 = vector.load %arg2[%c0, %c0_0, %c0_1] : memref<32x8x25xf32, #tpu.memory_space<vmem>>, vector<32x8x25xf32>
    %1 = vector.shape_cast %0 : vector<32x8x25xf32> to vector<256x25xf32>
    %c0_2 = arith.constant 0 : index
    %c0_3 = arith.constant 0 : index
    %2 = vector.load %arg3[%c0_2, %c0_3] : memref<25x30xf32, #tpu.memory_space<vmem>>, vector<25x30xf32>
    %cst = arith.constant dense<0.000000e+00> : vector<256x30xf32>
    %3 = tpu.matmul %1, %2, %cst {dimension_numbers = #tpu.dot_dimension_numbers<[1], [0], [0], [1], [0, 0, 1, 1], [], []>} : vector<256x25xf32>, vector<25x30xf32>, vector<256x30xf32> -> vector<256x30xf32>
    %c0_4 = arith.constant 0 : index
    %c0_5 = arith.constant 0 : index
    %4 = vector.load %arg4[%c0_4, %c0_5] : memref<1x30xf32, #tpu.memory_space<vmem>>, vector<1x30xf32>
    %5 = vector.broadcast %4 : vector<1x30xf32> to vector<256x30xf32>
    %6 = arith.addf %3, %5 : vector<256x30xf32>
    %cst_6 = arith.constant dense<0xFF800000> : vector<256xf32>
    %7 = vector.multi_reduction <maximumf>, %6, %cst_6 [1] : vector<256x30xf32> to vector<256xf32>
    %8 = vector.shape_cast %7 : vector<256xf32> to vector<256x1xf32>
    %9 = vector.broadcast %8 : vector<256x1xf32> to vector<256x30xf32>
    %10 = arith.subf %6, %9 : vector<256x30xf32>
    %11 = math.exp %10 : vector<256x30xf32>
    %cst_7 = arith.constant dense<0.000000e+00> : vector<256xf32>
    %12 = vector.multi_reduction <add>, %11, %cst_7 [1] : vector<256x30xf32> to vector<256xf32>
    %13 = vector.shape_cast %12 : vector<256xf32> to vector<256x1xf32>
    %14 = tpu.reciprocal %13 : vector<256x1xf32> -> vector<256x1xf32>
    %15 = vector.broadcast %14 : vector<256x1xf32> to vector<256x30xf32>
    %16 = arith.mulf %11, %15 : vector<256x30xf32>
    %17 = vector.shape_cast %16 : vector<256x30xf32> to vector<32x8x30xf32>
    %c0_8 = arith.constant 0 : index
    %c0_9 = arith.constant 0 : index
    %c0_10 = arith.constant 0 : index
    %18 = vector.load %arg1[%c0_8, %c0_9, %c0_10] : memref<32x8x1xf32, #tpu.memory_space<vmem>>, vector<32x8x1xf32>
    %19 = vector.broadcast %18 : vector<32x8x1xf32> to vector<32x8x30xf32>
    %20 = arith.mulf %19, %17 : vector<32x8x30xf32>
    %cst_11 = arith.constant dense<0.000000e+00> : vector<32x30xf32>
    %21 = vector.multi_reduction <add>, %20, %cst_11 [1] : vector<32x8x30xf32> to vector<32x30xf32>
    %c0_12 = arith.constant 0 : index
    %c0_13 = arith.constant 0 : index
    %22 = vector.load %arg5[%c0_12, %c0_13] : memref<30x50xf32, #tpu.memory_space<vmem>>, vector<30x50xf32>
    %cst_14 = arith.constant dense<0.000000e+00> : vector<32x50xf32>
    %23 = tpu.matmul %21, %22, %cst_14 {dimension_numbers = #tpu.dot_dimension_numbers<[1], [0], [0], [1], [0, 0, 1, 1], [], []>} : vector<32x30xf32>, vector<30x50xf32>, vector<32x50xf32> -> vector<32x50xf32>
    %c0_15 = arith.constant 0 : index
    %c0_16 = arith.constant 0 : index
    %24 = vector.load %arg6[%c0_15, %c0_16] : memref<1x50xf32, #tpu.memory_space<vmem>>, vector<1x50xf32>
    %25 = vector.broadcast %24 : vector<1x50xf32> to vector<32x50xf32>
    %26 = arith.addf %23, %25 : vector<32x50xf32>
    %cst_17 = arith.constant 0.000000e+00 : f32
    %27 = vector.broadcast %cst_17 : f32 to vector<32x50xf32>
    %28 = arith.maximumf %26, %27 : vector<32x50xf32>
    %29 = math.absf %26 : vector<32x50xf32>
    %cst_18 = arith.constant 0.000000e+00 : f32
    %30 = vector.broadcast %cst_18 : f32 to vector<32x50xf32>
    %31 = arith.subf %30, %29 : vector<32x50xf32>
    %32 = math.exp %31 : vector<32x50xf32>
    %33 = math.log1p %32 : vector<32x50xf32>
    %34 = arith.addf %28, %33 : vector<32x50xf32>
    %35 = tpu.iota {dimensions = array<i32: 1>} : vector<32x50xi32>
    %c25_i32 = arith.constant 25 : i32
    %36 = vector.broadcast %c25_i32 : i32 to vector<32x50xi32>
    %37 = arith.cmpi slt, %35, %36 : vector<32x50xi32>
    %38 = arith.select %37, %26, %34 : vector<32x50xi1>, vector<32x50xf32>
    %c0_19 = arith.constant 0 : index
    %c0_20 = arith.constant 0 : index
    %39 = vector.load %arg7[%c0_19, %c0_20] : memref<32x50xf32, #tpu.memory_space<vmem>>, vector<32x50xf32>
    tpu.vector_store %arg7[%c0_19, %c0_20], %38 {strides = array<i32>} : memref<32x50xf32, #tpu.memory_space<vmem>>, vector<32x50xf32>,
    return
  }
  func.func @transform_0(%arg0: i32) -> (i32, i32, i32) {
    %c0_i32 = arith.constant 0 : i32
    %c0_i32_0 = arith.constant 0 : i32
    %c0_i32_1 = arith.constant 0 : i32
    return %arg0, %c0_i32, %c0_i32_0 : i32, i32, i32
  }
  func.func @transform_1(%arg0: i32) -> (i32, i32, i32) {
    %c0_i32 = arith.constant 0 : i32
    %c0_i32_0 = arith.constant 0 : i32
    %c0_i32_1 = arith.constant 0 : i32
    return %arg0, %c0_i32, %c0_i32_0 : i32, i32, i32
  }
  func.func @transform_2(%arg0: i32) -> (i32, i32) {
    %c0_i32 = arith.constant 0 : i32
    %c0_i32_0 = arith.constant 0 : i32
    %c0_i32_1 = arith.constant 0 : i32
    return %c0_i32, %c0_i32_0 : i32, i32
  }
  func.func @transform_3(%arg0: i32) -> (i32, i32) {
    %c0_i32 = arith.constant 0 : i32
    %c0_i32_0 = arith.constant 0 : i32
    %c0_i32_1 = arith.constant 0 : i32
    return %c0_i32, %c0_i32_0 : i32, i32
  }
  func.func @transform_4(%arg0: i32) -> (i32, i32) {
    %c0_i32 = arith.constant 0 : i32
    %c0_i32_0 = arith.constant 0 : i32
    %c0_i32_1 = arith.constant 0 : i32
    return %c0_i32, %c0_i32_0 : i32, i32
  }
  func.func @transform_5(%arg0: i32) -> (i32, i32) {
    %c0_i32 = arith.constant 0 : i32
    %c0_i32_0 = arith.constant 0 : i32
    %c0_i32_1 = arith.constant 0 : i32
    return %c0_i32, %c0_i32_0 : i32, i32
  }
  func.func @transform_6(%arg0: i32) -> (i32, i32) {
    %c0_i32 = arith.constant 0 : i32
    %c0_i32_0 = arith.constant 0 : i32
    return %arg0, %c0_i32 : i32, i32
  }
}

</mosaic_0001>

<llo_original>
// kernel: tpu_custom_call.1
$region0: #{tpu_custom_call.1}
  #allocation0 [shape = 'u32[]', space=smem, size = 0x4, offset = 0x4, fixed_abs, tag = 'smem constant byte address 0x4 - core index']
  #allocation1 [shape = 'u32[72,128]{1,0:T(1,128)}', space=vmem, size = 0x9000, scoped, tag = 'internal scratch']
  %s0 = inlined_call_operand.vmem [shape: f32[32,8,1], index: 0, kind: input, shape index: {}]
  %s1 = inlined_call_operand.vmem [shape: f32[32,8,25], index: 1, kind: input, shape index: {}]
  %s2 = inlined_call_operand.vmem [shape: f32[25,30], index: 2, kind: input, shape index: {}]
  %s3 = inlined_call_operand.vmem [shape: f32[1,30], index: 3, kind: input, shape index: {}]
  %s4 = inlined_call_operand.vmem [shape: f32[30,50], index: 4, kind: input, shape index: {}]
  %s5 = inlined_call_operand.vmem [shape: f32[1,50], index: 5, kind: input, shape index: {}]
  %s6 = inlined_call_operand.hbm [shape: f32[32,50], index: 6, kind: output, shape index: {}]
  %s7 = sld [smem:[#allocation0]]
  $region34: #{tpu_custom_call.1} parent=0
    _
  %s9 = ssub.s32 1, %s7
  %s10 = scalar_select 0, %s9, %s7
  $region1: #{tpu_custom_call.1} parent=0
    #allocation2 [shape = 'u8[16384]{0}', space=vmem, size = 0x4000, scoped, tag = 'output window, operand 0, single buffered']
    #allocation3 [shape = 's32[1]{0}', space=sflag, size = 0x4, scoped, tag = 'scoped memory for tpu_custom_call.1']
    %11 = vsyncpa [#allocation3], 0
    // Predicated region
    $region2: #{tpu_custom_call.1} parent=1 // pred_check
      _
    $region3: #{tpu_custom_call.1} parent=1 // pred_check_branch
      %13 = sbr.rel (0) target = $region5
    $region4: #{tpu_custom_call.1} parent=1 // pred_region
      _
    $region5: #{tpu_custom_call.1} parent=1 // pred_fallthru
      _
    // Predicated region
    $region6: #{tpu_custom_call.1} parent=1 // pred_check
      _
    $region7: #{tpu_custom_call.1} parent=1 // pred_check_branch
      %15 = sbr.rel (0) target = $region9
    $region8: #{tpu_custom_call.1} parent=1 // pred_region
      _
    $region9: #{tpu_custom_call.1} parent=1 // pred_fallthru
      _
    // Predicated region
    $region10: #{tpu_custom_call.1} parent=1 // pred_check
      _
    $region11: #{tpu_custom_call.1} parent=1 // pred_check_branch
      %17 = sbr.rel (0) target = $region13
    $region12: #{tpu_custom_call.1} parent=1 // pred_region
      _
    $region13: #{tpu_custom_call.1} parent=1 // pred_fallthru
      _
    // Predicated region
    $region14: #{tpu_custom_call.1} parent=1 // pred_check
      _
    $region15: #{tpu_custom_call.1} parent=1 // pred_check_branch
      %19 = sbr.rel (0) target = $region17
    $region16: #{tpu_custom_call.1} parent=1 // pred_region
      _
    $region17: #{tpu_custom_call.1} parent=1 // pred_fallthru
      _
    // Predicated region
    $region18: #{tpu_custom_call.1} parent=1 // pred_check
      _
    $region19: #{tpu_custom_call.1} parent=1 // pred_check_branch
      %21 = sbr.rel (0) target = $region21
    $region20: #{tpu_custom_call.1} parent=1 // pred_region
      _
    $region21: #{tpu_custom_call.1} parent=1 // pred_fallthru
      _
    // Predicated region
    $region22: #{tpu_custom_call.1} parent=1 // pred_check
      _
    $region23: #{tpu_custom_call.1} parent=1 // pred_check_branch
      %23 = sbr.rel (0) target = $region25
    $region24: #{tpu_custom_call.1} parent=1 // pred_region
      _
    $region25: #{tpu_custom_call.1} parent=1 // pred_fallthru
      _
    %v24 = vld [vmem:[%s1] sm:$0xff]
    %v25 = vld [vmem:[%s1 + $0x8] sm:$0xff]
    %v26 = vld [vmem:[%s1 + $0x10] sm:$0xff]
    %v27 = vld [vmem:[%s1 + $0x18] sm:$0xff]
    %v28 = vld [vmem:[%s1 + $0x20] sm:$0xff]
    %v29 = vld [vmem:[%s1 + $0x28] sm:$0xff]
    %v30 = vld [vmem:[%s1 + $0x30] sm:$0xff]
    %v31 = vld [vmem:[%s1 + $0x38] sm:$0xff]
    %v32 = vld [vmem:[%s1 + $0x40] sm:$0xff]
    %v33 = vld [vmem:[%s1 + $0x48] sm:$0xff]
    %v34 = vld [vmem:[%s1 + $0x50] sm:$0xff]
    %v35 = vld [vmem:[%s1 + $0x58] sm:$0xff]
    %v36 = vld [vmem:[%s1 + $0x60] sm:$0xff]
    %v37 = vld [vmem:[%s1 + $0x68] sm:$0xff]
    %v38 = vld [vmem:[%s1 + $0x70] sm:$0xff]
    %v39 = vld [vmem:[%s1 + $0x78] sm:$0xff]
    %v40 = vld [vmem:[%s1 + $0x80] sm:$0xff]
    %v41 = vld [vmem:[%s1 + $0x88] sm:$0xff]
    %v42 = vld [vmem:[%s1 + $0x90] sm:$0xff]
    %v43 = vld [vmem:[%s1 + $0x98] sm:$0xff]
    %v44 = vld [vmem:[%s1 + $0xa0] sm:$0xff]
    %v45 = vld [vmem:[%s1 + $0xa8] sm:$0xff]
    %v46 = vld [vmem:[%s1 + $0xb0] sm:$0xff]
    %v47 = vld [vmem:[%s1 + $0xb8] sm:$0xff]
    %v48 = vld [vmem:[%s1 + $0xc0] sm:$0xff]
    %v49 = vld [vmem:[%s1 + $0xc8] sm:$0xff]
    %v50 = vld [vmem:[%s1 + $0xd0] sm:$0xff]
    %v51 = vld [vmem:[%s1 + $0xd8] sm:$0xff]
    %v52 = vld [vmem:[%s1 + $0xe0] sm:$0xff]
    %v53 = vld [vmem:[%s1 + $0xe8] sm:$0xff]
    %v54 = vld [vmem:[%s1 + $0xf0] sm:$0xff]
    %v55 = vld [vmem:[%s1 + $0xf8] sm:$0xff]
    %v56 = vld [vmem:[%s2] sm:$0xff]
    %v57 = vld [vmem:[%s2 + $0x8] sm:$0xff]
    %v58 = vld [vmem:[%s2 + $0x10] sm:$0xff]
    %v59 = vld [vmem:[%s2 + $0x18] sm:$0x1]
    %v60 = vld [vmem:[%s3] sm:$0x1]
    %v62 = vperm.slane %v60, 0
    %vm64 = vcmask 203776
    %v66 = vsel %vm64, %v24, 0
    %v69 = vsel %vm64, %v25, 0
    %v72 = vsel %vm64, %v26, 0
    %v75 = vsel %vm64, %v27, 0
    %v78 = vsel %vm64, %v28, 0
    %v81 = vsel %vm64, %v29, 0
    %v84 = vsel %vm64, %v30, 0
    %v87 = vsel %vm64, %v31, 0
    %v90 = vsel %vm64, %v32, 0
    %v93 = vsel %vm64, %v33, 0
    %v96 = vsel %vm64, %v34, 0
    %v99 = vsel %vm64, %v35, 0
    %v102 = vsel %vm64, %v36, 0
    %v105 = vsel %vm64, %v37, 0
    %v108 = vsel %vm64, %v38, 0
    %v111 = vsel %vm64, %v39, 0
    %v114 = vsel %vm64, %v40, 0
    %v117 = vsel %vm64, %v41, 0
    %v120 = vsel %vm64, %v42, 0
    %v123 = vsel %vm64, %v43, 0
    %v126 = vsel %vm64, %v44, 0
    %v129 = vsel %vm64, %v45, 0
    %v132 = vsel %vm64, %v46, 0
    %v135 = vsel %vm64, %v47, 0
    %v138 = vsel %vm64, %v48, 0
    %v141 = vsel %vm64, %v49, 0
    %v144 = vsel %vm64, %v50, 0
    %v147 = vsel %vm64, %v51, 0
    %v150 = vsel %vm64, %v52, 0
    %v153 = vsel %vm64, %v53, 0
    %v156 = vsel %vm64, %v54, 0
    %v159 = vsel %vm64, %v55, 0
    %vm161 = vcmask 1040384
    %v163 = vsel %vm161, %v59, 0
    %165 = vmatpush.msra.mxu0 0.0
    %166 = vmatpush.msra.mxu0 0.0
    %167 = vmatpush.msra.mxu0 0.0
    %168 = vmatpush.msra.mxu0 0.0
    %169 = vmatpush.msra.mxu0 0.0
    %170 = vmatpush.msra.mxu0 0.0
    %171 = vmatpush.msra.mxu0 0.0
    %172 = vmatpush.msra.mxu0 0.0
    %173 = vmatpush.msra.mxu0 0.0
    %174 = vmatpush.msra.mxu0 0.0
    %175 = vmatpush.msra.mxu0 0.0
    %176 = vmatpush.msra.mxu0 0.0
    %177 = vmatpush.msra.mxu0 %v163
    %178 = vmatpush.msra.mxu0 %v58
    %179 = vmatpush.msra.mxu0 %v57
    %180 = vmatpush.msra.mxu0 %v56
    %181 = vmatmul.f32.gmra.mxu0 %v66
    %v182 = vpop.f32.mrf.mxu0
    %v183 = vadd.f32 %v62, %v182
    %184 = vmatmul.f32.gmra.mxu0 %v69
    %v185 = vpop.f32.mrf.mxu0
    %v186 = vadd.f32 %v62, %v185
    %187 = vmatmul.f32.gmra.mxu0 %v72
    %v188 = vpop.f32.mrf.mxu0
    %v189 = vadd.f32 %v62, %v188
    %190 = vmatmul.f32.gmra.mxu0 %v75
    %v191 = vpop.f32.mrf.mxu0
    %v192 = vadd.f32 %v62, %v191
    %193 = vmatmul.f32.gmra.mxu0 %v78
    %v194 = vpop.f32.mrf.mxu0
    %v195 = vadd.f32 %v62, %v194
    %196 = vmatmul.f32.gmra.mxu0 %v81
    %v197 = vpop.f32.mrf.mxu0
    %v198 = vadd.f32 %v62, %v197
    %199 = vmatmul.f32.gmra.mxu0 %v84
    %v200 = vpop.f32.mrf.mxu0
    %v201 = vadd.f32 %v62, %v200
    %202 = vmatmul.f32.gmra.mxu0 %v87
    %v203 = vpop.f32.mrf.mxu0
    %v204 = vadd.f32 %v62, %v203
    %205 = vmatmul.f32.gmra.mxu0 %v90
    %v206 = vpop.f32.mrf.mxu0
    %v207 = vadd.f32 %v62, %v206
    %208 = vmatmul.f32.gmra.mxu0 %v93
    %v209 = vpop.f32.mrf.mxu0
    %v210 = vadd.f32 %v62, %v209
    %211 = vmatmul.f32.gmra.mxu0 %v96
    %v212 = vpop.f32.mrf.mxu0
    %v213 = vadd.f32 %v62, %v212
    %214 = vmatmul.f32.gmra.mxu0 %v99
    %v215 = vpop.f32.mrf.mxu0
    %v216 = vadd.f32 %v62, %v215
    %217 = vmatmul.f32.gmra.mxu0 %v102
    %v218 = vpop.f32.mrf.mxu0
    %v219 = vadd.f32 %v62, %v218
    %220 = vmatmul.f32.gmra.mxu0 %v105
    %v221 = vpop.f32.mrf.mxu0
    %v222 = vadd.f32 %v62, %v221
    %223 = vmatmul.f32.gmra.mxu0 %v108
    %v224 = vpop.f32.mrf.mxu0
    %v225 = vadd.f32 %v62, %v224
    %226 = vmatmul.f32.gmra.mxu0 %v111
    %v227 = vpop.f32.mrf.mxu0
    %v228 = vadd.f32 %v62, %v227
    %229 = vmatmul.f32.gmra.mxu0 %v114
    %v230 = vpop.f32.mrf.mxu0
    %v231 = vadd.f32 %v62, %v230
    %232 = vmatmul.f32.gmra.mxu0 %v117
    %v233 = vpop.f32.mrf.mxu0
    %v234 = vadd.f32 %v62, %v233
    %235 = vmatmul.f32.gmra.mxu0 %v120
    %v236 = vpop.f32.mrf.mxu0
    %v237 = vadd.f32 %v62, %v236
    %238 = vmatmul.f32.gmra.mxu0 %v123
    %v239 = vpop.f32.mrf.mxu0
    %v240 = vadd.f32 %v62, %v239
    %241 = vmatmul.f32.gmra.mxu0 %v126
    %v242 = vpop.f32.mrf.mxu0
    %v243 = vadd.f32 %v62, %v242
    %244 = vmatmul.f32.gmra.mxu0 %v129
    %v245 = vpop.f32.mrf.mxu0
    %v246 = vadd.f32 %v62, %v245
    %247 = vmatmul.f32.gmra.mxu0 %v132
    %v248 = vpop.f32.mrf.mxu0
    %v249 = vadd.f32 %v62, %v248
    %250 = vmatmul.f32.gmra.mxu0 %v135
    %v251 = vpop.f32.mrf.mxu0
    %v252 = vadd.f32 %v62, %v251
    %253 = vmatmul.f32.gmra.mxu0 %v138
    %v254 = vpop.f32.mrf.mxu0
    %v255 = vadd.f32 %v62, %v254
    %256 = vmatmul.f32.gmra.mxu0 %v141
    %v257 = vpop.f32.mrf.mxu0
    %v258 = vadd.f32 %v62, %v257
    %259 = vmatmul.f32.gmra.mxu0 %v144
    %v260 = vpop.f32.mrf.mxu0
    %v261 = vadd.f32 %v62, %v260
    %262 = vmatmul.f32.gmra.mxu0 %v147
    %v263 = vpop.f32.mrf.mxu0
    %v264 = vadd.f32 %v62, %v263
    %265 = vmatmul.f32.gmra.mxu0 %v150
    %v266 = vpop.f32.mrf.mxu0
    %v267 = vadd.f32 %v62, %v266
    %268 = vmatmul.f32.gmra.mxu0 %v153
    %v269 = vpop.f32.mrf.mxu0
    %v270 = vadd.f32 %v62, %v269
    %271 = vmatmul.f32.gmra.mxu0 %v156
    %v272 = vpop.f32.mrf.mxu0
    %v273 = vadd.f32 %v62, %v272
    %274 = vmatmul.f32.gmra.mxu0 %v159
    %v275 = vpop.f32.mrf.mxu0
    %v276 = vadd.f32 %v62, %v275
    %277 = vdwg.mxu0
    %vm278 = vcmask 244736
    %v279 = vsel %vm278, %v183, -inf
    %280 = vmax.xlane.f32.xlu0 %v279
    %v281 = vpop.xlane.xlu0 %280
    %v282 = vsel %vm278, %v186, -inf
    %283 = vmax.xlane.f32.xlu0 %v282
    %v284 = vpop.xlane.xlu0 %283
    %v285 = vsel %vm278, %v189, -inf
    %286 = vmax.xlane.f32.xlu0 %v285
    %v287 = vpop.xlane.xlu0 %286
    %v288 = vsel %vm278, %v192, -inf
    %289 = vmax.xlane.f32.xlu0 %v288
    %v290 = vpop.xlane.xlu0 %289
    %v291 = vsel %vm278, %v195, -inf
    %292 = vmax.xlane.f32.xlu0 %v291
    %v293 = vpop.xlane.xlu0 %292
    %v294 = vsel %vm278, %v198, -inf
    %295 = vmax.xlane.f32.xlu0 %v294
    %v296 = vpop.xlane.xlu0 %295
    %v297 = vsel %vm278, %v201, -inf
    %298 = vmax.xlane.f32.xlu0 %v297
    %v299 = vpop.xlane.xlu0 %298
    %v300 = vsel %vm278, %v204, -inf
    %301 = vmax.xlane.f32.xlu0 %v300
    %v302 = vpop.xlane.xlu0 %301
    %v303 = vsel %vm278, %v207, -inf
    %304 = vmax.xlane.f32.xlu0 %v303
    %v305 = vpop.xlane.xlu0 %304
    %v306 = vsel %vm278, %v210, -inf
    %307 = vmax.xlane.f32.xlu0 %v306
    %v308 = vpop.xlane.xlu0 %307
    %v309 = vsel %vm278, %v213, -inf
    %310 = vmax.xlane.f32.xlu0 %v309
    %v311 = vpop.xlane.xlu0 %310
    %v312 = vsel %vm278, %v216, -inf
    %313 = vmax.xlane.f32.xlu0 %v312
    %v314 = vpop.xlane.xlu0 %313
    %v315 = vsel %vm278, %v219, -inf
    %316 = vmax.xlane.f32.xlu0 %v315
    %v317 = vpop.xlane.xlu0 %316
    %v318 = vsel %vm278, %v222, -inf
    %319 = vmax.xlane.f32.xlu0 %v318
    %v320 = vpop.xlane.xlu0 %319
    %v321 = vsel %vm278, %v225, -inf
    %322 = vmax.xlane.f32.xlu0 %v321
    %v323 = vpop.xlane.xlu0 %322
    %v324 = vsel %vm278, %v228, -inf
    %325 = vmax.xlane.f32.xlu0 %v324
    %v326 = vpop.xlane.xlu0 %325
    %v327 = vsel %vm278, %v231, -inf
    %328 = vmax.xlane.f32.xlu0 %v327
    %v329 = vpop.xlane.xlu0 %328
    %v330 = vsel %vm278, %v234, -inf
    %331 = vmax.xlane.f32.xlu0 %v330
    %v332 = vpop.xlane.xlu0 %331
    %v333 = vsel %vm278, %v237, -inf
    %334 = vmax.xlane.f32.xlu0 %v333
    %v335 = vpop.xlane.xlu0 %334
    %v336 = vsel %vm278, %v240, -inf
    %337 = vmax.xlane.f32.xlu0 %v336
    %v338 = vpop.xlane.xlu0 %337
    %v339 = vsel %vm278, %v243, -inf
    %340 = vmax.xlane.f32.xlu0 %v339
    %v341 = vpop.xlane.xlu0 %340
    %v342 = vsel %vm278, %v246, -inf
    %343 = vmax.xlane.f32.xlu0 %v342
    %v344 = vpop.xlane.xlu0 %343
    %v345 = vsel %vm278, %v249, -inf
    %346 = vmax.xlane.f32.xlu0 %v345
    %v347 = vpop.xlane.xlu0 %346
    %v348 = vsel %vm278, %v252, -inf
    %349 = vmax.xlane.f32.xlu0 %v348
    %v350 = vpop.xlane.xlu0 %349
    %v351 = vsel %vm278, %v255, -inf
    %352 = vmax.xlane.f32.xlu0 %v351
    %v353 = vpop.xlane.xlu0 %352
    %v354 = vsel %vm278, %v258, -inf
    %355 = vmax.xlane.f32.xlu0 %v354
    %v356 = vpop.xlane.xlu0 %355
    %v357 = vsel %vm278, %v261, -inf
    %358 = vmax.xlane.f32.xlu0 %v357
    %v359 = vpop.xlane.xlu0 %358
    %v360 = vsel %vm278, %v264, -inf
    %361 = vmax.xlane.f32.xlu0 %v360
    %v362 = vpop.xlane.xlu0 %361
    %v363 = vsel %vm278, %v267, -inf
    %364 = vmax.xlane.f32.xlu0 %v363
    %v365 = vpop.xlane.xlu0 %364
    %v366 = vsel %vm278, %v270, -inf
    %367 = vmax.xlane.f32.xlu0 %v366
    %v368 = vpop.xlane.xlu0 %367
    %v369 = vsel %vm278, %v273, -inf
    %370 = vmax.xlane.f32.xlu0 %v369
    %v371 = vpop.xlane.xlu0 %370
    %v372 = vsel %vm278, %v276, -inf
    %373 = vmax.xlane.f32.xlu0 %v372
    %v374 = vpop.xlane.xlu0 %373
    %v375 = vsub.f32 %v183, %v281
    %v376 = vsub.f32 %v186, %v284
    %v377 = vsub.f32 %v189, %v287
    %v378 = vsub.f32 %v192, %v290
    %v379 = vsub.f32 %v195, %v293
    %v380 = vsub.f32 %v198, %v296
    %v381 = vsub.f32 %v201, %v299
    %v382 = vsub.f32 %v204, %v302
    %v383 = vsub.f32 %v207, %v305
    %v384 = vsub.f32 %v210, %v308
    %v385 = vsub.f32 %v213, %v311
    %v386 = vsub.f32 %v216, %v314
    %v387 = vsub.f32 %v219, %v317
    %v388 = vsub.f32 %v222, %v320
    %v389 = vsub.f32 %v225, %v323
    %v390 = vsub.f32 %v228, %v326
    %v391 = vsub.f32 %v231, %v329
    %v392 = vsub.f32 %v234, %v332
    %v393 = vsub.f32 %v237, %v335
    %v394 = vsub.f32 %v240, %v338
    %v395 = vsub.f32 %v243, %v341
    %v396 = vsub.f32 %v246, %v344
    %v397 = vsub.f32 %v249, %v347
    %v398 = vsub.f32 %v252, %v350
    %v399 = vsub.f32 %v255, %v353
    %v400 = vsub.f32 %v258, %v356
    %v401 = vsub.f32 %v261, %v359
    %v402 = vsub.f32 %v264, %v362
    %v403 = vsub.f32 %v267, %v365
    %v404 = vsub.f32 %v270, %v368
    %v405 = vsub.f32 %v273, %v371
    %v406 = vsub.f32 %v276, %v374
    %v407 = vmul.f32 %v375, 1.442695
    %v408 = vpow.pop %v407
    %v409 = vmul.f32 %v376, 1.442695
    %v410 = vpow.pop %v409
    %v411 = vmul.f32 %v377, 1.442695
    %v412 = vpow.pop %v411
    %v413 = vmul.f32 %v378, 1.442695
    %v414 = vpow.pop %v413
    %v415 = vmul.f32 %v379, 1.442695
    %v416 = vpow.pop %v415
    %v417 = vmul.f32 %v380, 1.442695
    %v418 = vpow.pop %v417
    %v419 = vmul.f32 %v381, 1.442695
    %v420 = vpow.pop %v419
    %v421 = vmul.f32 %v382, 1.442695
    %v422 = vpow.pop %v421
    %v423 = vmul.f32 %v383, 1.442695
    %v424 = vpow.pop %v423
    %v425 = vmul.f32 %v384, 1.442695
    %v426 = vpow.pop %v425
    %v427 = vmul.f32 %v385, 1.442695
    %v428 = vpow.pop %v427
    %v429 = vmul.f32 %v386, 1.442695
    %v430 = vpow.pop %v429
    %v431 = vmul.f32 %v387, 1.442695
    %v432 = vpow.pop %v431
    %v433 = vmul.f32 %v388, 1.442695
    %v434 = vpow.pop %v433
    %v435 = vmul.f32 %v389, 1.442695
    %v436 = vpow.pop %v435
    %v437 = vmul.f32 %v390, 1.442695
    %v438 = vpow.pop %v437
    %v439 = vmul.f32 %v391, 1.442695
    %v440 = vpow.pop %v439
    %v441 = vmul.f32 %v392, 1.442695
    %v442 = vpow.pop %v441
    %v443 = vmul.f32 %v393, 1.442695
    %v444 = vpow.pop %v443
    %v445 = vmul.f32 %v394, 1.442695
    %v446 = vpow.pop %v445
    %v447 = vmul.f32 %v395, 1.442695
    %v448 = vpow.pop %v447
    %v449 = vmul.f32 %v396, 1.442695
    %v450 = vpow.pop %v449
    %v451 = vmul.f32 %v397, 1.442695
    %v452 = vpow.pop %v451
    %v453 = vmul.f32 %v398, 1.442695
    %v454 = vpow.pop %v453
    %v455 = vmul.f32 %v399, 1.442695
    %v456 = vpow.pop %v455
    %v457 = vmul.f32 %v400, 1.442695
    %v458 = vpow.pop %v457
    %v459 = vmul.f32 %v401, 1.442695
    %v460 = vpow.pop %v459
    %v461 = vmul.f32 %v402, 1.442695
    %v462 = vpow.pop %v461
    %v463 = vmul.f32 %v403, 1.442695
    %v464 = vpow.pop %v463
    %v465 = vmul.f32 %v404, 1.442695
    %v466 = vpow.pop %v465
    %v467 = vmul.f32 %v405, 1.442695
    %v468 = vpow.pop %v467
    %v469 = vmul.f32 %v406, 1.442695
    %v470 = vpow.pop %v469
    %v471 = vsel %vm278, %v408, 0.0
    %472 = vadd.xlane.f32.xlu0 %v471
    %v473 = vpop.xlane.xlu0 %472
    %v474 = vsel %vm278, %v410, 0.0
    %475 = vadd.xlane.f32.xlu0 %v474
    %v476 = vpop.xlane.xlu0 %475
    %v477 = vsel %vm278, %v412, 0.0
    %478 = vadd.xlane.f32.xlu0 %v477
    %v479 = vpop.xlane.xlu0 %478
    %v480 = vsel %vm278, %v414, 0.0
    %481 = vadd.xlane.f32.xlu0 %v480
    %v482 = vpop.xlane.xlu0 %481
    %v483 = vsel %vm278, %v416, 0.0
    %484 = vadd.xlane.f32.xlu0 %v483
    %v485 = vpop.xlane.xlu0 %484
    %v486 = vsel %vm278, %v418, 0.0
    %487 = vadd.xlane.f32.xlu0 %v486
    %v488 = vpop.xlane.xlu0 %487
    %v489 = vsel %vm278, %v420, 0.0
    %490 = vadd.xlane.f32.xlu0 %v489
    %v491 = vpop.xlane.xlu0 %490
    %v492 = vsel %vm278, %v422, 0.0
    %493 = vadd.xlane.f32.xlu0 %v492
    %v494 = vpop.xlane.xlu0 %493
    %v495 = vsel %vm278, %v424, 0.0
    %496 = vadd.xlane.f32.xlu0 %v495
    %v497 = vpop.xlane.xlu0 %496
    %v498 = vsel %vm278, %v426, 0.0
    %499 = vadd.xlane.f32.xlu0 %v498
    %v500 = vpop.xlane.xlu0 %499
    %v501 = vsel %vm278, %v428, 0.0
    %502 = vadd.xlane.f32.xlu0 %v501
    %v503 = vpop.xlane.xlu0 %502
    %v504 = vsel %vm278, %v430, 0.0
    %505 = vadd.xlane.f32.xlu0 %v504
    %v506 = vpop.xlane.xlu0 %505
    %v507 = vsel %vm278, %v432, 0.0
    %508 = vadd.xlane.f32.xlu0 %v507
    %v509 = vpop.xlane.xlu0 %508
    %v510 = vsel %vm278, %v434, 0.0
    %511 = vadd.xlane.f32.xlu0 %v510
    %v512 = vpop.xlane.xlu0 %511
    %v513 = vsel %vm278, %v436, 0.0
    %514 = vadd.xlane.f32.xlu0 %v513
    %v515 = vpop.xlane.xlu0 %514
    %v516 = vsel %vm278, %v438, 0.0
    %517 = vadd.xlane.f32.xlu0 %v516
    %v518 = vpop.xlane.xlu0 %517
    %v519 = vsel %vm278, %v440, 0.0
    %520 = vadd.xlane.f32.xlu0 %v519
    %v521 = vpop.xlane.xlu0 %520
    %v522 = vsel %vm278, %v442, 0.0
    %523 = vadd.xlane.f32.xlu0 %v522
    %v524 = vpop.xlane.xlu0 %523
    %v525 = vsel %vm278, %v444, 0.0
    %526 = vadd.xlane.f32.xlu0 %v525
    %v527 = vpop.xlane.xlu0 %526
    %v528 = vsel %vm278, %v446, 0.0
    %529 = vadd.xlane.f32.xlu0 %v528
    %v530 = vpop.xlane.xlu0 %529
    %v531 = vsel %vm278, %v448, 0.0
    %532 = vadd.xlane.f32.xlu0 %v531
    %v533 = vpop.xlane.xlu0 %532
    %v534 = vsel %vm278, %v450, 0.0
    %535 = vadd.xlane.f32.xlu0 %v534
    %v536 = vpop.xlane.xlu0 %535
    %v537 = vsel %vm278, %v452, 0.0
    %538 = vadd.xlane.f32.xlu0 %v537
    %v539 = vpop.xlane.xlu0 %538
    %v540 = vsel %vm278, %v454, 0.0
    %541 = vadd.xlane.f32.xlu0 %v540
    %v542 = vpop.xlane.xlu0 %541
    %v543 = vsel %vm278, %v456, 0.0
    %544 = vadd.xlane.f32.xlu0 %v543
    %v545 = vpop.xlane.xlu0 %544
    %v546 = vsel %vm278, %v458, 0.0
    %547 = vadd.xlane.f32.xlu0 %v546
    %v548 = vpop.xlane.xlu0 %547
    %v549 = vsel %vm278, %v460, 0.0
    %550 = vadd.xlane.f32.xlu0 %v549
    %v551 = vpop.xlane.xlu0 %550
    %v552 = vsel %vm278, %v462, 0.0
    %553 = vadd.xlane.f32.xlu0 %v552
    %v554 = vpop.xlane.xlu0 %553
    %v555 = vsel %vm278, %v464, 0.0
    %556 = vadd.xlane.f32.xlu0 %v555
    %v557 = vpop.xlane.xlu0 %556
    %v558 = vsel %vm278, %v466, 0.0
    %559 = vadd.xlane.f32.xlu0 %v558
    %v560 = vpop.xlane.xlu0 %559
    %v561 = vsel %vm278, %v468, 0.0
    %562 = vadd.xlane.f32.xlu0 %v561
    %v563 = vpop.xlane.xlu0 %562
    %v564 = vsel %vm278, %v470, 0.0
    %565 = vadd.xlane.f32.xlu0 %v564
    %v566 = vpop.xlane.xlu0 %565
    %v567 = vrcp.pop %v473
    %v568 = vmul.f32 %v473, %v567
    %v569 = vsub.f32 1.0, %v568
    %v570 = vmul.f32 %v567, %v569
    %v571 = vadd.f32 %v567, %v570
    %vm572 = vweird.f32 %v473
    %vm573 = vweird.f32 %v567
    %vm574 = vmor %vm572, %vm573
    %v575 = vsel %vm574, %v567, %v571
    %v576 = vand.u32 2147483647, %v473
    %vm577 = vcmp.eq.f32.partialorder %v576, 8.507059e+37
    %v578 = vand.u32 %v473, 2147483648
    %v579 = vor.u32 1.1754944e-38, %v578
    %v580 = vsel %vm577, %v579, %v575
    %v581 = vrcp.pop %v476
    %v582 = vmul.f32 %v476, %v581
    %v583 = vsub.f32 1.0, %v582
    %v584 = vmul.f32 %v581, %v583
    %v585 = vadd.f32 %v581, %v584
    %vm586 = vweird.f32 %v476
    %vm587 = vweird.f32 %v581
    %vm588 = vmor %vm586, %vm587
    %v589 = vsel %vm588, %v581, %v585
    %v590 = vand.u32 2147483647, %v476
    %vm591 = vcmp.eq.f32.partialorder %v590, 8.507059e+37
    %v592 = vand.u32 %v476, 2147483648
    %v593 = vor.u32 1.1754944e-38, %v592
    %v594 = vsel %vm591, %v593, %v589
    %v595 = vrcp.pop %v479
    %v596 = vmul.f32 %v479, %v595
    %v597 = vsub.f32 1.0, %v596
    %v598 = vmul.f32 %v595, %v597
    %v599 = vadd.f32 %v595, %v598
    %vm600 = vweird.f32 %v479
    %vm601 = vweird.f32 %v595
    %vm602 = vmor %vm600, %vm601
    %v603 = vsel %vm602, %v595, %v599
    %v604 = vand.u32 2147483647, %v479
    %vm605 = vcmp.eq.f32.partialorder %v604, 8.507059e+37
    %v606 = vand.u32 %v479, 2147483648
    %v607 = vor.u32 1.1754944e-38, %v606
    %v608 = vsel %vm605, %v607, %v603
    %v609 = vrcp.pop %v482
    %v610 = vmul.f32 %v482, %v609
    %v611 = vsub.f32 1.0, %v610
    %v612 = vmul.f32 %v609, %v611
    %v613 = vadd.f32 %v609, %v612
    %vm614 = vweird.f32 %v482
    %vm615 = vweird.f32 %v609
    %vm616 = vmor %vm614, %vm615
    %v617 = vsel %vm616, %v609, %v613
    %v618 = vand.u32 2147483647, %v482
    %vm619 = vcmp.eq.f32.partialorder %v618, 8.507059e+37
    %v620 = vand.u32 %v482, 2147483648
    %v621 = vor.u32 1.1754944e-38, %v620
    %v622 = vsel %vm619, %v621, %v617
    %v623 = vrcp.pop %v485
    %v624 = vmul.f32 %v485, %v623
    %v625 = vsub.f32 1.0, %v624
    %v626 = vmul.f32 %v623, %v625
    %v627 = vadd.f32 %v623, %v626
    %vm628 = vweird.f32 %v485
    %vm629 = vweird.f32 %v623
    %vm630 = vmor %vm628, %vm629
    %v631 = vsel %vm630, %v623, %v627
    %v632 = vand.u32 2147483647, %v485
    %vm633 = vcmp.eq.f32.partialorder %v632, 8.507059e+37
    %v634 = vand.u32 %v485, 2147483648
    %v635 = vor.u32 1.1754944e-38, %v634
    %v636 = vsel %vm633, %v635, %v631
    %v637 = vrcp.pop %v488
    %v638 = vmul.f32 %v488, %v637
    %v639 = vsub.f32 1.0, %v638
    %v640 = vmul.f32 %v637, %v639
    %v641 = vadd.f32 %v637, %v640
    %vm642 = vweird.f32 %v488
    %vm643 = vweird.f32 %v637
    %vm644 = vmor %vm642, %vm643
    %v645 = vsel %vm644, %v637, %v641
    %v646 = vand.u32 2147483647, %v488
    %vm647 = vcmp.eq.f32.partialorder %v646, 8.507059e+37
    %v648 = vand.u32 %v488, 2147483648
    %v649 = vor.u32 1.1754944e-38, %v648
    %v650 = vsel %vm647, %v649, %v645
    %v651 = vrcp.pop %v491
    %v652 = vmul.f32 %v491, %v651
    %v653 = vsub.f32 1.0, %v652
    %v654 = vmul.f32 %v651, %v653
    %v655 = vadd.f32 %v651, %v654
    %vm656 = vweird.f32 %v491
    %vm657 = vweird.f32 %v651
    %vm658 = vmor %vm656, %vm657
    %v659 = vsel %vm658, %v651, %v655
    %v660 = vand.u32 2147483647, %v491
    %vm661 = vcmp.eq.f32.partialorder %v660, 8.507059e+37
    %v662 = vand.u32 %v491, 2147483648
    %v663 = vor.u32 1.1754944e-38, %v662
    %v664 = vsel %vm661, %v663, %v659
    %v665 = vrcp.pop %v494
    %v666 = vmul.f32 %v494, %v665
    %v667 = vsub.f32 1.0, %v666
    %v668 = vmul.f32 %v665, %v667
    %v669 = vadd.f32 %v665, %v668
    %vm670 = vweird.f32 %v494
    %vm671 = vweird.f32 %v665
    %vm672 = vmor %vm670, %vm671
    %v673 = vsel %vm672, %v665, %v669
    %v674 = vand.u32 2147483647, %v494
    %vm675 = vcmp.eq.f32.partialorder %v674, 8.507059e+37
    %v676 = vand.u32 %v494, 2147483648
    %v677 = vor.u32 1.1754944e-38, %v676
    %v678 = vsel %vm675, %v677, %v673
    %v679 = vrcp.pop %v497
    %v680 = vmul.f32 %v497, %v679
    %v681 = vsub.f32 1.0, %v680
    %v682 = vmul.f32 %v679, %v681
    %v683 = vadd.f32 %v679, %v682
    %vm684 = vweird.f32 %v497
    %vm685 = vweird.f32 %v679
    %vm686 = vmor %vm684, %vm685
    %v687 = vsel %vm686, %v679, %v683
    %v688 = vand.u32 2147483647, %v497
    %vm689 = vcmp.eq.f32.partialorder %v688, 8.507059e+37
    %v690 = vand.u32 %v497, 2147483648
    %v691 = vor.u32 1.1754944e-38, %v690
    %v692 = vsel %vm689, %v691, %v687
    %v693 = vrcp.pop %v500
    %v694 = vmul.f32 %v500, %v693
    %v695 = vsub.f32 1.0, %v694
    %v696 = vmul.f32 %v693, %v695
    %v697 = vadd.f32 %v693, %v696
    %vm698 = vweird.f32 %v500
    %vm699 = vweird.f32 %v693
    %vm700 = vmor %vm698, %vm699
    %v701 = vsel %vm700, %v693, %v697
    %v702 = vand.u32 2147483647, %v500
    %vm703 = vcmp.eq.f32.partialorder %v702, 8.507059e+37
    %v704 = vand.u32 %v500, 2147483648
    %v705 = vor.u32 1.1754944e-38, %v704
    %v706 = vsel %vm703, %v705, %v701
    %v707 = vrcp.pop %v503
    %v708 = vmul.f32 %v503, %v707
    %v709 = vsub.f32 1.0, %v708
    %v710 = vmul.f32 %v707, %v709
    %v711 = vadd.f32 %v707, %v710
    %vm712 = vweird.f32 %v503
    %vm713 = vweird.f32 %v707
    %vm714 = vmor %vm712, %vm713
    %v715 = vsel %vm714, %v707, %v711
    %v716 = vand.u32 2147483647, %v503
    %vm717 = vcmp.eq.f32.partialorder %v716, 8.507059e+37
    %v718 = vand.u32 %v503, 2147483648
    %v719 = vor.u32 1.1754944e-38, %v718
    %v720 = vsel %vm717, %v719, %v715
    %v721 = vrcp.pop %v506
    %v722 = vmul.f32 %v506, %v721
    %v723 = vsub.f32 1.0, %v722
    %v724 = vmul.f32 %v721, %v723
    %v725 = vadd.f32 %v721, %v724
    %vm726 = vweird.f32 %v506
    %vm727 = vweird.f32 %v721
    %vm728 = vmor %vm726, %vm727
    %v729 = vsel %vm728, %v721, %v725
    %v730 = vand.u32 2147483647, %v506
    %vm731 = vcmp.eq.f32.partialorder %v730, 8.507059e+37
    %v732 = vand.u32 %v506, 2147483648
    %v733 = vor.u32 1.1754944e-38, %v732
    %v734 = vsel %vm731, %v733, %v729
    %v735 = vrcp.pop %v509
    %v736 = vmul.f32 %v509, %v735
    %v737 = vsub.f32 1.0, %v736
    %v738 = vmul.f32 %v735, %v737
    %v739 = vadd.f32 %v735, %v738
    %vm740 = vweird.f32 %v509
    %vm741 = vweird.f32 %v735
    %vm742 = vmor %vm740, %vm741
    %v743 = vsel %vm742, %v735, %v739
    %v744 = vand.u32 2147483647, %v509
    %vm745 = vcmp.eq.f32.partialorder %v744, 8.507059e+37
    %v746 = vand.u32 %v509, 2147483648
    %v747 = vor.u32 1.1754944e-38, %v746
    %v748 = vsel %vm745, %v747, %v743
    %v749 = vrcp.pop %v512
    %v750 = vmul.f32 %v512, %v749
    %v751 = vsub.f32 1.0, %v750
    %v752 = vmul.f32 %v749, %v751
    %v753 = vadd.f32 %v749, %v752
    %vm754 = vweird.f32 %v512
    %vm755 = vweird.f32 %v749
    %vm756 = vmor %vm754, %vm755
    %v757 = vsel %vm756, %v749, %v753
    %v758 = vand.u32 2147483647, %v512
    %vm759 = vcmp.eq.f32.partialorder %v758, 8.507059e+37
    %v760 = vand.u32 %v512, 2147483648
    %v761 = vor.u32 1.1754944e-38, %v760
    %v762 = vsel %vm759, %v761, %v757
    %v763 = vrcp.pop %v515
    %v764 = vmul.f32 %v515, %v763
    %v765 = vsub.f32 1.0, %v764
    %v766 = vmul.f32 %v763, %v765
    %v767 = vadd.f32 %v763, %v766
    %vm768 = vweird.f32 %v515
    %vm769 = vweird.f32 %v763
    %vm770 = vmor %vm768, %vm769
    %v771 = vsel %vm770, %v763, %v767
    %v772 = vand.u32 2147483647, %v515
    %vm773 = vcmp.eq.f32.partialorder %v772, 8.507059e+37
    %v774 = vand.u32 %v515, 2147483648
    %v775 = vor.u32 1.1754944e-38, %v774
    %v776 = vsel %vm773, %v775, %v771
    %v777 = vrcp.pop %v518
    %v778 = vmul.f32 %v518, %v777
    %v779 = vsub.f32 1.0, %v778
    %v780 = vmul.f32 %v777, %v779
    %v781 = vadd.f32 %v777, %v780
    %vm782 = vweird.f32 %v518
    %vm783 = vweird.f32 %v777
    %vm784 = vmor %vm782, %vm783
    %v785 = vsel %vm784, %v777, %v781
    %v786 = vand.u32 2147483647, %v518
    %vm787 = vcmp.eq.f32.partialorder %v786, 8.507059e+37
    %v788 = vand.u32 %v518, 2147483648
    %v789 = vor.u32 1.1754944e-38, %v788
    %v790 = vsel %vm787, %v789, %v785
    %v791 = vrcp.pop %v521
    %v792 = vmul.f32 %v521, %v791
    %v793 = vsub.f32 1.0, %v792
    %v794 = vmul.f32 %v791, %v793
    %v795 = vadd.f32 %v791, %v794
    %vm796 = vweird.f32 %v521
    %vm797 = vweird.f32 %v791
    %vm798 = vmor %vm796, %vm797
    %v799 = vsel %vm798, %v791, %v795
    %v800 = vand.u32 2147483647, %v521
    %vm801 = vcmp.eq.f32.partialorder %v800, 8.507059e+37
    %v802 = vand.u32 %v521, 2147483648
    %v803 = vor.u32 1.1754944e-38, %v802
    %v804 = vsel %vm801, %v803, %v799
    %v805 = vrcp.pop %v524
    %v806 = vmul.f32 %v524, %v805
    %v807 = vsub.f32 1.0, %v806
    %v808 = vmul.f32 %v805, %v807
    %v809 = vadd.f32 %v805, %v808
    %vm810 = vweird.f32 %v524
    %vm811 = vweird.f32 %v805
    %vm812 = vmor %vm810, %vm811
    %v813 = vsel %vm812, %v805, %v809
    %v814 = vand.u32 2147483647, %v524
    %vm815 = vcmp.eq.f32.partialorder %v814, 8.507059e+37
    %v816 = vand.u32 %v524, 2147483648
    %v817 = vor.u32 1.1754944e-38, %v816
    %v818 = vsel %vm815, %v817, %v813
    %v819 = vrcp.pop %v527
    %v820 = vmul.f32 %v527, %v819
    %v821 = vsub.f32 1.0, %v820
    %v822 = vmul.f32 %v819, %v821
    %v823 = vadd.f32 %v819, %v822
    %vm824 = vweird.f32 %v527
    %vm825 = vweird.f32 %v819
    %vm826 = vmor %vm824, %vm825
    %v827 = vsel %vm826, %v819, %v823
    %v828 = vand.u32 2147483647, %v527
    %vm829 = vcmp.eq.f32.partialorder %v828, 8.507059e+37
    %v830 = vand.u32 %v527, 2147483648
    %v831 = vor.u32 1.1754944e-38, %v830
    %v832 = vsel %vm829, %v831, %v827
    %v833 = vrcp.pop %v530
    %v834 = vmul.f32 %v530, %v833
    %v835 = vsub.f32 1.0, %v834
    %v836 = vmul.f32 %v833, %v835
    %v837 = vadd.f32 %v833, %v836
    %vm838 = vweird.f32 %v530
    %vm839 = vweird.f32 %v833
    %vm840 = vmor %vm838, %vm839
    %v841 = vsel %vm840, %v833, %v837
    %v842 = vand.u32 2147483647, %v530
    %vm843 = vcmp.eq.f32.partialorder %v842, 8.507059e+37
    %v844 = vand.u32 %v530, 2147483648
    %v845 = vor.u32 1.1754944e-38, %v844
    %v846 = vsel %vm843, %v845, %v841
    %v847 = vrcp.pop %v533
    %v848 = vmul.f32 %v533, %v847
    %v849 = vsub.f32 1.0, %v848
    %v850 = vmul.f32 %v847, %v849
    %v851 = vadd.f32 %v847, %v850
    %vm852 = vweird.f32 %v533
    %vm853 = vweird.f32 %v847
    %vm854 = vmor %vm852, %vm853
    %v855 = vsel %vm854, %v847, %v851
    %v856 = vand.u32 2147483647, %v533
    %vm857 = vcmp.eq.f32.partialorder %v856, 8.507059e+37
    %v858 = vand.u32 %v533, 2147483648
    %v859 = vor.u32 1.1754944e-38, %v858
    %v860 = vsel %vm857, %v859, %v855
    %v861 = vrcp.pop %v536
    %v862 = vmul.f32 %v536, %v861
    %v863 = vsub.f32 1.0, %v862
    %v864 = vmul.f32 %v861, %v863
    %v865 = vadd.f32 %v861, %v864
    %vm866 = vweird.f32 %v536
    %vm867 = vweird.f32 %v861
    %vm868 = vmor %vm866, %vm867
    %v869 = vsel %vm868, %v861, %v865
    %v870 = vand.u32 2147483647, %v536
    %vm871 = vcmp.eq.f32.partialorder %v870, 8.507059e+37
    %v872 = vand.u32 %v536, 2147483648
    %v873 = vor.u32 1.1754944e-38, %v872
    %v874 = vsel %vm871, %v873, %v869
    %v875 = vrcp.pop %v539
    %v876 = vmul.f32 %v539, %v875
    %v877 = vsub.f32 1.0, %v876
    %v878 = vmul.f32 %v875, %v877
    %v879 = vadd.f32 %v875, %v878
    %vm880 = vweird.f32 %v539
    %vm881 = vweird.f32 %v875
    %vm882 = vmor %vm880, %vm881
    %v883 = vsel %vm882, %v875, %v879
    %v884 = vand.u32 2147483647, %v539
    %vm885 = vcmp.eq.f32.partialorder %v884, 8.507059e+37
    %v886 = vand.u32 %v539, 2147483648
    %v887 = vor.u32 1.1754944e-38, %v886
    %v888 = vsel %vm885, %v887, %v883
    %v889 = vrcp.pop %v542
    %v890 = vmul.f32 %v542, %v889
    %v891 = vsub.f32 1.0, %v890
    %v892 = vmul.f32 %v889, %v891
    %v893 = vadd.f32 %v889, %v892
    %vm894 = vweird.f32 %v542
    %vm895 = vweird.f32 %v889
    %vm896 = vmor %vm894, %vm895
    %v897 = vsel %vm896, %v889, %v893
    %v898 = vand.u32 2147483647, %v542
    %vm899 = vcmp.eq.f32.partialorder %v898, 8.507059e+37
    %v900 = vand.u32 %v542, 2147483648
    %v901 = vor.u32 1.1754944e-38, %v900
    %v902 = vsel %vm899, %v901, %v897
    %v903 = vrcp.pop %v545
    %v904 = vmul.f32 %v545, %v903
    %v905 = vsub.f32 1.0, %v904
    %v906 = vmul.f32 %v903, %v905
    %v907 = vadd.f32 %v903, %v906
    %vm908 = vweird.f32 %v545
    %vm909 = vweird.f32 %v903
    %vm910 = vmor %vm908, %vm909
    %v911 = vsel %vm910, %v903, %v907
    %v912 = vand.u32 2147483647, %v545
    %vm913 = vcmp.eq.f32.partialorder %v912, 8.507059e+37
    %v914 = vand.u32 %v545, 2147483648
    %v915 = vor.u32 1.1754944e-38, %v914
    %v916 = vsel %vm913, %v915, %v911
    %v917 = vrcp.pop %v548
    %v918 = vmul.f32 %v548, %v917
    %v919 = vsub.f32 1.0, %v918
    %v920 = vmul.f32 %v917, %v919
    %v921 = vadd.f32 %v917, %v920
    %vm922 = vweird.f32 %v548
    %vm923 = vweird.f32 %v917
    %vm924 = vmor %vm922, %vm923
    %v925 = vsel %vm924, %v917, %v921
    %v926 = vand.u32 2147483647, %v548
    %vm927 = vcmp.eq.f32.partialorder %v926, 8.507059e+37
    %v928 = vand.u32 %v548, 2147483648
    %v929 = vor.u32 1.1754944e-38, %v928
    %v930 = vsel %vm927, %v929, %v925
    %v931 = vrcp.pop %v551
    %v932 = vmul.f32 %v551, %v931
    %v933 = vsub.f32 1.0, %v932
    %v934 = vmul.f32 %v931, %v933
    %v935 = vadd.f32 %v931, %v934
    %vm936 = vweird.f32 %v551
    %vm937 = vweird.f32 %v931
    %vm938 = vmor %vm936, %vm937
    %v939 = vsel %vm938, %v931, %v935
    %v940 = vand.u32 2147483647, %v551
    %vm941 = vcmp.eq.f32.partialorder %v940, 8.507059e+37
    %v942 = vand.u32 %v551, 2147483648
    %v943 = vor.u32 1.1754944e-38, %v942
    %v944 = vsel %vm941, %v943, %v939
    %v945 = vrcp.pop %v554
    %v946 = vmul.f32 %v554, %v945
    %v947 = vsub.f32 1.0, %v946
    %v948 = vmul.f32 %v945, %v947
    %v949 = vadd.f32 %v945, %v948
    %vm950 = vweird.f32 %v554
    %vm951 = vweird.f32 %v945
    %vm952 = vmor %vm950, %vm951
    %v953 = vsel %vm952, %v945, %v949
    %v954 = vand.u32 2147483647, %v554
    %vm955 = vcmp.eq.f32.partialorder %v954, 8.507059e+37
    %v956 = vand.u32 %v554, 2147483648
    %v957 = vor.u32 1.1754944e-38, %v956
    %v958 = vsel %vm955, %v957, %v953
    %v959 = vrcp.pop %v557
    %v960 = vmul.f32 %v557, %v959
    %v961 = vsub.f32 1.0, %v960
    %v962 = vmul.f32 %v959, %v961
    %v963 = vadd.f32 %v959, %v962
    %vm964 = vweird.f32 %v557
    %vm965 = vweird.f32 %v959
    %vm966 = vmor %vm964, %vm965
    %v967 = vsel %vm966, %v959, %v963
    %v968 = vand.u32 2147483647, %v557
    %vm969 = vcmp.eq.f32.partialorder %v968, 8.507059e+37
    %v970 = vand.u32 %v557, 2147483648
    %v971 = vor.u32 1.1754944e-38, %v970
    %v972 = vsel %vm969, %v971, %v967
    %v973 = vrcp.pop %v560
    %v974 = vmul.f32 %v560, %v973
    %v975 = vsub.f32 1.0, %v974
    %v976 = vmul.f32 %v973, %v975
    %v977 = vadd.f32 %v973, %v976
    %vm978 = vweird.f32 %v560
    %vm979 = vweird.f32 %v973
    %vm980 = vmor %vm978, %vm979
    %v981 = vsel %vm980, %v973, %v977
    %v982 = vand.u32 2147483647, %v560
    %vm983 = vcmp.eq.f32.partialorder %v982, 8.507059e+37
    %v984 = vand.u32 %v560, 2147483648
    %v985 = vor.u32 1.1754944e-38, %v984
    %v986 = vsel %vm983, %v985, %v981
    %v987 = vrcp.pop %v563
    %v988 = vmul.f32 %v563, %v987
    %v989 = vsub.f32 1.0, %v988
    %v990 = vmul.f32 %v987, %v989
    %v991 = vadd.f32 %v987, %v990
    %vm992 = vweird.f32 %v563
    %vm993 = vweird.f32 %v987
    %vm994 = vmor %vm992, %vm993
    %v995 = vsel %vm994, %v987, %v991
    %v996 = vand.u32 2147483647, %v563
    %vm997 = vcmp.eq.f32.partialorder %v996, 8.507059e+37
    %v998 = vand.u32 %v563, 2147483648
    %v999 = vor.u32 1.1754944e-38, %v998
    %v1000 = vsel %vm997, %v999, %v995
    %v1001 = vrcp.pop %v566
    %v1002 = vmul.f32 %v566, %v1001
    %v1003 = vsub.f32 1.0, %v1002
    %v1004 = vmul.f32 %v1001, %v1003
    %v1005 = vadd.f32 %v1001, %v1004
    %vm1006 = vweird.f32 %v566
    %vm1007 = vweird.f32 %v1001
    %vm1008 = vmor %vm1006, %vm1007
    %v1009 = vsel %vm1008, %v1001, %v1005
    %v1010 = vand.u32 2147483647, %v566
    %vm1011 = vcmp.eq.f32.partialorder %v1010, 8.507059e+37
    %v1012 = vand.u32 %v566, 2147483648
    %v1013 = vor.u32 1.1754944e-38, %v1012
    %v1014 = vsel %vm1011, %v1013, %v1009
    %v1015 = vmul.f32 %v408, %v580
    %v1016 = vmul.f32 %v410, %v594
    %v1017 = vmul.f32 %v412, %v608
    %v1018 = vmul.f32 %v414, %v622
    %v1019 = vmul.f32 %v416, %v636
    %v1020 = vmul.f32 %v418, %v650
    %v1021 = vmul.f32 %v420, %v664
    %v1022 = vmul.f32 %v422, %v678
    %v1023 = vmul.f32 %v424, %v692
    %v1024 = vmul.f32 %v426, %v706
    %v1025 = vmul.f32 %v428, %v720
    %v1026 = vmul.f32 %v430, %v734
    %v1027 = vmul.f32 %v432, %v748
    %v1028 = vmul.f32 %v434, %v762
    %v1029 = vmul.f32 %v436, %v776
    %v1030 = vmul.f32 %v438, %v790
    %v1031 = vmul.f32 %v440, %v804
    %v1032 = vmul.f32 %v442, %v818
    %v1033 = vmul.f32 %v444, %v832
    %v1034 = vmul.f32 %v446, %v846
    %v1035 = vmul.f32 %v448, %v860
    %v1036 = vmul.f32 %v450, %v874
    %v1037 = vmul.f32 %v452, %v888
    %v1038 = vmul.f32 %v454, %v902
    %v1039 = vmul.f32 %v456, %v916
    %v1040 = vmul.f32 %v458, %v930
    %v1041 = vmul.f32 %v460, %v944
    %v1042 = vmul.f32 %v462, %v958
    %v1043 = vmul.f32 %v464, %v972
    %v1044 = vmul.f32 %v466, %v986
    %v1045 = vmul.f32 %v468, %v1000
    %v1046 = vmul.f32 %v470, %v1014
    %v1047 = vld [vmem:[%s0] sm:$0xff]
    %v1048 = vld [vmem:[%s0 + $0x8] sm:$0xff]
    %v1049 = vld [vmem:[%s0 + $0x10] sm:$0xff]
    %v1050 = vld [vmem:[%s0 + $0x18] sm:$0xff]
    %v1051 = vld [vmem:[%s0 + $0x20] sm:$0xff]
    %v1052 = vld [vmem:[%s0 + $0x28] sm:$0xff]
    %v1053 = vld [vmem:[%s0 + $0x30] sm:$0xff]
    %v1054 = vld [vmem:[%s0 + $0x38] sm:$0xff]
    %v1055 = vld [vmem:[%s0 + $0x40] sm:$0xff]
    %v1056 = vld [vmem:[%s0 + $0x48] sm:$0xff]
    %v1057 = vld [vmem:[%s0 + $0x50] sm:$0xff]
    %v1058 = vld [vmem:[%s0 + $0x58] sm:$0xff]
    %v1059 = vld [vmem:[%s0 + $0x60] sm:$0xff]
    %v1060 = vld [vmem:[%s0 + $0x68] sm:$0xff]
    %v1061 = vld [vmem:[%s0 + $0x70] sm:$0xff]
    %v1062 = vld [vmem:[%s0 + $0x78] sm:$0xff]
    %v1063 = vld [vmem:[%s0 + $0x80] sm:$0xff]
    %v1064 = vld [vmem:[%s0 + $0x88] sm:$0xff]
    %v1065 = vld [vmem:[%s0 + $0x90] sm:$0xff]
    %v1066 = vld [vmem:[%s0 + $0x98] sm:$0xff]
    %v1067 = vld [vmem:[%s0 + $0xa0] sm:$0xff]
    %v1068 = vld [vmem:[%s0 + $0xa8] sm:$0xff]
    %v1069 = vld [vmem:[%s0 + $0xb0] sm:$0xff]
    %v1070 = vld [vmem:[%s0 + $0xb8] sm:$0xff]
    %v1071 = vld [vmem:[%s0 + $0xc0] sm:$0xff]
    %v1072 = vld [vmem:[%s0 + $0xc8] sm:$0xff]
    %v1073 = vld [vmem:[%s0 + $0xd0] sm:$0xff]
    %v1074 = vld [vmem:[%s0 + $0xd8] sm:$0xff]
    %v1075 = vld [vmem:[%s0 + $0xe0] sm:$0xff]
    %v1076 = vld [vmem:[%s0 + $0xe8] sm:$0xff]
    %v1077 = vld [vmem:[%s0 + $0xf0] sm:$0xff]
    %v1078 = vld [vmem:[%s0 + $0xf8] sm:$0xff]
    %1080 = vset.pattern.permute.xlu0 0
    %1081 = vperm.xlu0 %1080, %v1047
    %v1082 = vpop.permute.xlu0 %1081
    %1085 = vset.pattern.permute.xlu0 0
    %1086 = vperm.xlu0 %1085, %v1048
    %v1087 = vpop.permute.xlu0 %1086
    %1090 = vset.pattern.permute.xlu0 0
    %1091 = vperm.xlu0 %1090, %v1049
    %v1092 = vpop.permute.xlu0 %1091
    %1095 = vset.pattern.permute.xlu0 0
    %1096 = vperm.xlu0 %1095, %v1050
    %v1097 = vpop.permute.xlu0 %1096
    %1100 = vset.pattern.permute.xlu0 0
    %1101 = vperm.xlu0 %1100, %v1051
    %v1102 = vpop.permute.xlu0 %1101
    %1105 = vset.pattern.permute.xlu0 0
    %1106 = vperm.xlu0 %1105, %v1052
    %v1107 = vpop.permute.xlu0 %1106
    %1110 = vset.pattern.permute.xlu0 0
    %1111 = vperm.xlu0 %1110, %v1053
    %v1112 = vpop.permute.xlu0 %1111
    %1115 = vset.pattern.permute.xlu0 0
    %1116 = vperm.xlu0 %1115, %v1054
    %v1117 = vpop.permute.xlu0 %1116
    %1120 = vset.pattern.permute.xlu0 0
    %1121 = vperm.xlu0 %1120, %v1055
    %v1122 = vpop.permute.xlu0 %1121
    %1125 = vset.pattern.permute.xlu0 0
    %1126 = vperm.xlu0 %1125, %v1056
    %v1127 = vpop.permute.xlu0 %1126
    %1130 = vset.pattern.permute.xlu0 0
    %1131 = vperm.xlu0 %1130, %v1057
    %v1132 = vpop.permute.xlu0 %1131
    %1135 = vset.pattern.permute.xlu0 0
    %1136 = vperm.xlu0 %1135, %v1058
    %v1137 = vpop.permute.xlu0 %1136
    %1140 = vset.pattern.permute.xlu0 0
    %1141 = vperm.xlu0 %1140, %v1059
    %v1142 = vpop.permute.xlu0 %1141
    %1145 = vset.pattern.permute.xlu0 0
    %1146 = vperm.xlu0 %1145, %v1060
    %v1147 = vpop.permute.xlu0 %1146
    %1150 = vset.pattern.permute.xlu0 0
    %1151 = vperm.xlu0 %1150, %v1061
    %v1152 = vpop.permute.xlu0 %1151
    %1155 = vset.pattern.permute.xlu0 0
    %1156 = vperm.xlu0 %1155, %v1062
    %v1157 = vpop.permute.xlu0 %1156
    %1160 = vset.pattern.permute.xlu0 0
    %1161 = vperm.xlu0 %1160, %v1063
    %v1162 = vpop.permute.xlu0 %1161
    %1165 = vset.pattern.permute.xlu0 0
    %1166 = vperm.xlu0 %1165, %v1064
    %v1167 = vpop.permute.xlu0 %1166
    %1170 = vset.pattern.permute.xlu0 0
    %1171 = vperm.xlu0 %1170, %v1065
    %v1172 = vpop.permute.xlu0 %1171
    %1175 = vset.pattern.permute.xlu0 0
    %1176 = vperm.xlu0 %1175, %v1066
    %v1177 = vpop.permute.xlu0 %1176
    %1180 = vset.pattern.permute.xlu0 0
    %1181 = vperm.xlu0 %1180, %v1067
    %v1182 = vpop.permute.xlu0 %1181
    %1185 = vset.pattern.permute.xlu0 0
    %1186 = vperm.xlu0 %1185, %v1068
    %v1187 = vpop.permute.xlu0 %1186
    %1190 = vset.pattern.permute.xlu0 0
    %1191 = vperm.xlu0 %1190, %v1069
    %v1192 = vpop.permute.xlu0 %1191
    %1195 = vset.pattern.permute.xlu0 0
    %1196 = vperm.xlu0 %1195, %v1070
    %v1197 = vpop.permute.xlu0 %1196
    %1200 = vset.pattern.permute.xlu0 0
    %1201 = vperm.xlu0 %1200, %v1071
    %v1202 = vpop.permute.xlu0 %1201
    %1205 = vset.pattern.permute.xlu0 0
    %1206 = vperm.xlu0 %1205, %v1072
    %v1207 = vpop.permute.xlu0 %1206
    %1210 = vset.pattern.permute.xlu0 0
    %1211 = vperm.xlu0 %1210, %v1073
    %v1212 = vpop.permute.xlu0 %1211
    %1215 = vset.pattern.permute.xlu0 0
    %1216 = vperm.xlu0 %1215, %v1074
    %v1217 = vpop.permute.xlu0 %1216
    %1220 = vset.pattern.permute.xlu0 0
    %1221 = vperm.xlu0 %1220, %v1075
    %v1222 = vpop.permute.xlu0 %1221
    %1225 = vset.pattern.permute.xlu0 0
    %1226 = vperm.xlu0 %1225, %v1076
    %v1227 = vpop.permute.xlu0 %1226
    %1230 = vset.pattern.permute.xlu0 0
    %1231 = vperm.xlu0 %1230, %v1077
    %v1232 = vpop.permute.xlu0 %1231
    %1235 = vset.pattern.permute.xlu0 0
    %1236 = vperm.xlu0 %1235, %v1078
    %v1237 = vpop.permute.xlu0 %1236
    %v1239 = vmul.f32 %v1082, %v1015
    %v1240 = vmul.f32 %v1087, %v1016
    %v1241 = vmul.f32 %v1092, %v1017
    %v1242 = vmul.f32 %v1097, %v1018
    %v1243 = vmul.f32 %v1102, %v1019
    %v1244 = vmul.f32 %v1107, %v1020
    %v1245 = vmul.f32 %v1112, %v1021
    %v1246 = vmul.f32 %v1117, %v1022
    %v1247 = vmul.f32 %v1122, %v1023
    %v1248 = vmul.f32 %v1127, %v1024
    %v1249 = vmul.f32 %v1132, %v1025
    %v1250 = vmul.f32 %v1137, %v1026
    %v1251 = vmul.f32 %v1142, %v1027
    %v1252 = vmul.f32 %v1147, %v1028
    %v1253 = vmul.f32 %v1152, %v1029
    %v1254 = vmul.f32 %v1157, %v1030
    %v1255 = vmul.f32 %v1162, %v1031
    %v1256 = vmul.f32 %v1167, %v1032
    %v1257 = vmul.f32 %v1172, %v1033
    %v1258 = vmul.f32 %v1177, %v1034
    %v1259 = vmul.f32 %v1182, %v1035
    %v1260 = vmul.f32 %v1187, %v1036
    %v1261 = vmul.f32 %v1192, %v1037
    %v1262 = vmul.f32 %v1197, %v1038
    %v1263 = vmul.f32 %v1202, %v1039
    %v1264 = vmul.f32 %v1207, %v1040
    %v1265 = vmul.f32 %v1212, %v1041
    %v1266 = vmul.f32 %v1217, %v1042
    %v1267 = vmul.f32 %v1222, %v1043
    %v1268 = vmul.f32 %v1227, %v1044
    %v1269 = vmul.f32 %v1232, %v1045
    %v1270 = vmul.f32 %v1237, %v1046
    %v1271 = vsel %vm278, %v1239, 0.0
    %v1272 = vrot.slane %v1271, 4
    %v1273 = vadd.f32 %v1271, %v1272
    %v1274 = vrot.slane %v1273, 2
    %v1275 = vadd.f32 %v1273, %v1274
    %v1276 = vrot.slane %v1275, 1
    %v1277 = vadd.f32 %v1275, %v1276
    %v1278 = vsel %vm278, %v1240, 0.0
    %v1279 = vrot.slane %v1278, 4
    %v1280 = vadd.f32 %v1278, %v1279
    %v1281 = vrot.slane %v1280, 2
    %v1282 = vadd.f32 %v1280, %v1281
    %v1283 = vrot.slane %v1282, 1
    %v1284 = vadd.f32 %v1282, %v1283
    %v1285 = vsel %vm278, %v1241, 0.0
    %v1286 = vrot.slane %v1285, 4
    %v1287 = vadd.f32 %v1285, %v1286
    %v1288 = vrot.slane %v1287, 2
    %v1289 = vadd.f32 %v1287, %v1288
    %v1290 = vrot.slane %v1289, 1
    %v1291 = vadd.f32 %v1289, %v1290
    %v1292 = vsel %vm278, %v1242, 0.0
    %v1293 = vrot.slane %v1292, 4
    %v1294 = vadd.f32 %v1292, %v1293
    %v1295 = vrot.slane %v1294, 2
    %v1296 = vadd.f32 %v1294, %v1295
    %v1297 = vrot.slane %v1296, 1
    %v1298 = vadd.f32 %v1296, %v1297
    %v1299 = vsel %vm278, %v1243, 0.0
    %v1300 = vrot.slane %v1299, 4
    %v1301 = vadd.f32 %v1299, %v1300
    %v1302 = vrot.slane %v1301, 2
    %v1303 = vadd.f32 %v1301, %v1302
    %v1304 = vrot.slane %v1303, 1
    %v1305 = vadd.f32 %v1303, %v1304
    %v1306 = vsel %vm278, %v1244, 0.0
    %v1307 = vrot.slane %v1306, 4
    %v1308 = vadd.f32 %v1306, %v1307
    %v1309 = vrot.slane %v1308, 2
    %v1310 = vadd.f32 %v1308, %v1309
    %v1311 = vrot.slane %v1310, 1
    %v1312 = vadd.f32 %v1310, %v1311
    %v1313 = vsel %vm278, %v1245, 0.0
    %v1314 = vrot.slane %v1313, 4
    %v1315 = vadd.f32 %v1313, %v1314
    %v1316 = vrot.slane %v1315, 2
    %v1317 = vadd.f32 %v1315, %v1316
    %v1318 = vrot.slane %v1317, 1
    %v1319 = vadd.f32 %v1317, %v1318
    %v1320 = vsel %vm278, %v1246, 0.0
    %v1321 = vrot.slane %v1320, 4
    %v1322 = vadd.f32 %v1320, %v1321
    %v1323 = vrot.slane %v1322, 2
    %v1324 = vadd.f32 %v1322, %v1323
    %v1325 = vrot.slane %v1324, 1
    %v1326 = vadd.f32 %v1324, %v1325
    %v1327 = vsel %vm278, %v1247, 0.0
    %v1328 = vrot.slane %v1327, 4
    %v1329 = vadd.f32 %v1327, %v1328
    %v1330 = vrot.slane %v1329, 2
    %v1331 = vadd.f32 %v1329, %v1330
    %v1332 = vrot.slane %v1331, 1
    %v1333 = vadd.f32 %v1331, %v1332
    %v1334 = vsel %vm278, %v1248, 0.0
    %v1335 = vrot.slane %v1334, 4
    %v1336 = vadd.f32 %v1334, %v1335
    %v1337 = vrot.slane %v1336, 2
    %v1338 = vadd.f32 %v1336, %v1337
    %v1339 = vrot.slane %v1338, 1
    %v1340 = vadd.f32 %v1338, %v1339
    %v1341 = vsel %vm278, %v1249, 0.0
    %v1342 = vrot.slane %v1341, 4
    %v1343 = vadd.f32 %v1341, %v1342
    %v1344 = vrot.slane %v1343, 2
    %v1345 = vadd.f32 %v1343, %v1344
    %v1346 = vrot.slane %v1345, 1
    %v1347 = vadd.f32 %v1345, %v1346
    %v1348 = vsel %vm278, %v1250, 0.0
    %v1349 = vrot.slane %v1348, 4
    %v1350 = vadd.f32 %v1348, %v1349
    %v1351 = vrot.slane %v1350, 2
    %v1352 = vadd.f32 %v1350, %v1351
    %v1353 = vrot.slane %v1352, 1
    %v1354 = vadd.f32 %v1352, %v1353
    %v1355 = vsel %vm278, %v1251, 0.0
    %v1356 = vrot.slane %v1355, 4
    %v1357 = vadd.f32 %v1355, %v1356
    %v1358 = vrot.slane %v1357, 2
    %v1359 = vadd.f32 %v1357, %v1358
    %v1360 = vrot.slane %v1359, 1
    %v1361 = vadd.f32 %v1359, %v1360
    %v1362 = vsel %vm278, %v1252, 0.0
    %v1363 = vrot.slane %v1362, 4
    %v1364 = vadd.f32 %v1362, %v1363
    %v1365 = vrot.slane %v1364, 2
    %v1366 = vadd.f32 %v1364, %v1365
    %v1367 = vrot.slane %v1366, 1
    %v1368 = vadd.f32 %v1366, %v1367
    %v1369 = vsel %vm278, %v1253, 0.0
    %v1370 = vrot.slane %v1369, 4
    %v1371 = vadd.f32 %v1369, %v1370
    %v1372 = vrot.slane %v1371, 2
    %v1373 = vadd.f32 %v1371, %v1372
    %v1374 = vrot.slane %v1373, 1
    %v1375 = vadd.f32 %v1373, %v1374
    %v1376 = vsel %vm278, %v1254, 0.0
    %v1377 = vrot.slane %v1376, 4
    %v1378 = vadd.f32 %v1376, %v1377
    %v1379 = vrot.slane %v1378, 2
    %v1380 = vadd.f32 %v1378, %v1379
    %v1381 = vrot.slane %v1380, 1
    %v1382 = vadd.f32 %v1380, %v1381
    %v1383 = vsel %vm278, %v1255, 0.0
    %v1384 = vrot.slane %v1383, 4
    %v1385 = vadd.f32 %v1383, %v1384
    %v1386 = vrot.slane %v1385, 2
    %v1387 = vadd.f32 %v1385, %v1386
    %v1388 = vrot.slane %v1387, 1
    %v1389 = vadd.f32 %v1387, %v1388
    %v1390 = vsel %vm278, %v1256, 0.0
    %v1391 = vrot.slane %v1390, 4
    %v1392 = vadd.f32 %v1390, %v1391
    %v1393 = vrot.slane %v1392, 2
    %v1394 = vadd.f32 %v1392, %v1393
    %v1395 = vrot.slane %v1394, 1
    %v1396 = vadd.f32 %v1394, %v1395
    %v1397 = vsel %vm278, %v1257, 0.0
    %v1398 = vrot.slane %v1397, 4
    %v1399 = vadd.f32 %v1397, %v1398
    %v1400 = vrot.slane %v1399, 2
    %v1401 = vadd.f32 %v1399, %v1400
    %v1402 = vrot.slane %v1401, 1
    %v1403 = vadd.f32 %v1401, %v1402
    %v1404 = vsel %vm278, %v1258, 0.0
    %v1405 = vrot.slane %v1404, 4
    %v1406 = vadd.f32 %v1404, %v1405
    %v1407 = vrot.slane %v1406, 2
    %v1408 = vadd.f32 %v1406, %v1407
    %v1409 = vrot.slane %v1408, 1
    %v1410 = vadd.f32 %v1408, %v1409
    %v1411 = vsel %vm278, %v1259, 0.0
    %v1412 = vrot.slane %v1411, 4
    %v1413 = vadd.f32 %v1411, %v1412
    %v1414 = vrot.slane %v1413, 2
    %v1415 = vadd.f32 %v1413, %v1414
    %v1416 = vrot.slane %v1415, 1
    %v1417 = vadd.f32 %v1415, %v1416
    %v1418 = vsel %vm278, %v1260, 0.0
    %v1419 = vrot.slane %v1418, 4
    %v1420 = vadd.f32 %v1418, %v1419
    %v1421 = vrot.slane %v1420, 2
    %v1422 = vadd.f32 %v1420, %v1421
    %v1423 = vrot.slane %v1422, 1
    %v1424 = vadd.f32 %v1422, %v1423
    %v1425 = vsel %vm278, %v1261, 0.0
    %v1426 = vrot.slane %v1425, 4
    %v1427 = vadd.f32 %v1425, %v1426
    %v1428 = vrot.slane %v1427, 2
    %v1429 = vadd.f32 %v1427, %v1428
    %v1430 = vrot.slane %v1429, 1
    %v1431 = vadd.f32 %v1429, %v1430
    %v1432 = vsel %vm278, %v1262, 0.0
    %v1433 = vrot.slane %v1432, 4
    %v1434 = vadd.f32 %v1432, %v1433
    %v1435 = vrot.slane %v1434, 2
    %v1436 = vadd.f32 %v1434, %v1435
    %v1437 = vrot.slane %v1436, 1
    %v1438 = vadd.f32 %v1436, %v1437
    %v1439 = vsel %vm278, %v1263, 0.0
    %v1440 = vrot.slane %v1439, 4
    %v1441 = vadd.f32 %v1439, %v1440
    %v1442 = vrot.slane %v1441, 2
    %v1443 = vadd.f32 %v1441, %v1442
    %v1444 = vrot.slane %v1443, 1
    %v1445 = vadd.f32 %v1443, %v1444
    %v1446 = vsel %vm278, %v1264, 0.0
    %v1447 = vrot.slane %v1446, 4
    %v1448 = vadd.f32 %v1446, %v1447
    %v1449 = vrot.slane %v1448, 2
    %v1450 = vadd.f32 %v1448, %v1449
    %v1451 = vrot.slane %v1450, 1
    %v1452 = vadd.f32 %v1450, %v1451
    %v1453 = vsel %vm278, %v1265, 0.0
    %v1454 = vrot.slane %v1453, 4
    %v1455 = vadd.f32 %v1453, %v1454
    %v1456 = vrot.slane %v1455, 2
    %v1457 = vadd.f32 %v1455, %v1456
    %v1458 = vrot.slane %v1457, 1
    %v1459 = vadd.f32 %v1457, %v1458
    %v1460 = vsel %vm278, %v1266, 0.0
    %v1461 = vrot.slane %v1460, 4
    %v1462 = vadd.f32 %v1460, %v1461
    %v1463 = vrot.slane %v1462, 2
    %v1464 = vadd.f32 %v1462, %v1463
    %v1465 = vrot.slane %v1464, 1
    %v1466 = vadd.f32 %v1464, %v1465
    %v1467 = vsel %vm278, %v1267, 0.0
    %v1468 = vrot.slane %v1467, 4
    %v1469 = vadd.f32 %v1467, %v1468
    %v1470 = vrot.slane %v1469, 2
    %v1471 = vadd.f32 %v1469, %v1470
    %v1472 = vrot.slane %v1471, 1
    %v1473 = vadd.f32 %v1471, %v1472
    %v1474 = vsel %vm278, %v1268, 0.0
    %v1475 = vrot.slane %v1474, 4
    %v1476 = vadd.f32 %v1474, %v1475
    %v1477 = vrot.slane %v1476, 2
    %v1478 = vadd.f32 %v1476, %v1477
    %v1479 = vrot.slane %v1478, 1
    %v1480 = vadd.f32 %v1478, %v1479
    %v1481 = vsel %vm278, %v1269, 0.0
    %v1482 = vrot.slane %v1481, 4
    %v1483 = vadd.f32 %v1481, %v1482
    %v1484 = vrot.slane %v1483, 2
    %v1485 = vadd.f32 %v1483, %v1484
    %v1486 = vrot.slane %v1485, 1
    %v1487 = vadd.f32 %v1485, %v1486
    %v1488 = vsel %vm278, %v1270, 0.0
    %v1489 = vrot.slane %v1488, 4
    %v1490 = vadd.f32 %v1488, %v1489
    %v1491 = vrot.slane %v1490, 2
    %v1492 = vadd.f32 %v1490, %v1491
    %v1493 = vrot.slane %v1492, 1
    %v1494 = vadd.f32 %v1492, %v1493
    %v1495 = vld [vmem:[%s4] sm:$0xff]
    %v1496 = vld [vmem:[%s4 + $0x8] sm:$0xff]
    %v1497 = vld [vmem:[%s4 + $0x10] sm:$0xff]
    %v1498 = vld [vmem:[%s4 + $0x18] sm:$0x3f]
    %v1499 = vld [vmem:[%s5] sm:$0x1]
    %v1501 = vperm.slane %v1499, 0
    %vm1535 = vcmask 1041409
    %v1536 = vsel %vm1535, %v1284, %v1277
    %vm1537 = vcmask 1042434
    %v1538 = vsel %vm1537, %v1291, %v1536
    %vm1539 = vcmask 1043459
    %v1540 = vsel %vm1539, %v1298, %v1538
    %vm1541 = vcmask 1044484
    %v1542 = vsel %vm1541, %v1305, %v1540
    %vm1543 = vcmask 1045509
    %v1544 = vsel %vm1543, %v1312, %v1542
    %vm1545 = vcmask 1046534
    %v1546 = vsel %vm1545, %v1319, %v1544
    %vm1547 = vcmask 1047559
    %v1548 = vsel %vm1547, %v1326, %v1546
    %v1549 = vsel %vm1535, %v1340, %v1333
    %v1550 = vsel %vm1537, %v1347, %v1549
    %v1551 = vsel %vm1539, %v1354, %v1550
    %v1552 = vsel %vm1541, %v1361, %v1551
    %v1553 = vsel %vm1543, %v1368, %v1552
    %v1554 = vsel %vm1545, %v1375, %v1553
    %v1555 = vsel %vm1547, %v1382, %v1554
    %v1556 = vsel %vm1535, %v1396, %v1389
    %v1557 = vsel %vm1537, %v1403, %v1556
    %v1558 = vsel %vm1539, %v1410, %v1557
    %v1559 = vsel %vm1541, %v1417, %v1558
    %v1560 = vsel %vm1543, %v1424, %v1559
    %v1561 = vsel %vm1545, %v1431, %v1560
    %v1562 = vsel %vm1547, %v1438, %v1561
    %v1563 = vsel %vm1535, %v1452, %v1445
    %v1564 = vsel %vm1537, %v1459, %v1563
    %v1565 = vsel %vm1539, %v1466, %v1564
    %v1566 = vsel %vm1541, %v1473, %v1565
    %v1567 = vsel %vm1543, %v1480, %v1566
    %v1568 = vsel %vm1545, %v1487, %v1567
    %v1569 = vsel %vm1547, %v1494, %v1568
    %v1570 = vsel %vm278, %v1548, 0
    %v1572 = vsel %vm278, %v1555, 0
    %v1574 = vsel %vm278, %v1562, 0
    %v1576 = vsel %vm278, %v1569, 0
    %vm1578 = vcmask 1045504
    %v1580 = vsel %vm1578, %v1498, 0
    %1582 = vmatpush.msra.mxu0 0.0
    %1583 = vmatpush.msra.mxu0 0.0
    %1584 = vmatpush.msra.mxu0 0.0
    %1585 = vmatpush.msra.mxu0 0.0
    %1586 = vmatpush.msra.mxu0 0.0
    %1587 = vmatpush.msra.mxu0 0.0
    %1588 = vmatpush.msra.mxu0 0.0
    %1589 = vmatpush.msra.mxu0 0.0
    %1590 = vmatpush.msra.mxu0 0.0
    %1591 = vmatpush.msra.mxu0 0.0
    %1592 = vmatpush.msra.mxu0 0.0
    %1593 = vmatpush.msra.mxu0 0.0
    %1594 = vmatpush.msra.mxu0 %v1580
    %1595 = vmatpush.msra.mxu0 %v1497
    %1596 = vmatpush.msra.mxu0 %v1496
    %1597 = vmatpush.msra.mxu0 %v1495
    %1598 = vmatmul.f32.gmra.mxu0 %v1570
    %v1599 = vpop.f32.mrf.mxu0
    %v1600 = vadd.f32 %v1501, %v1599
    %1601 = vmatmul.f32.gmra.mxu0 %v1572
    %v1602 = vpop.f32.mrf.mxu0
    %v1603 = vadd.f32 %v1501, %v1602
    %1604 = vmatmul.f32.gmra.mxu0 %v1574
    %v1605 = vpop.f32.mrf.mxu0
    %v1606 = vadd.f32 %v1501, %v1605
    %1607 = vmatmul.f32.gmra.mxu0 %v1576
    %v1608 = vpop.f32.mrf.mxu0
    %v1609 = vadd.f32 %v1501, %v1608
    %1610 = vdwg.mxu0
    %v1611 = vmax.f32 %v1600, 0.0
    %v1612 = vmax.f32 %v1603, 0.0
    %v1613 = vmax.f32 %v1606, 0.0
    %v1614 = vmax.f32 %v1609, 0.0
    %v1615 = vand.u32 2147483647, %v1600
    %v1616 = vand.u32 2147483647, %v1603
    %v1617 = vand.u32 2147483647, %v1606
    %v1618 = vand.u32 2147483647, %v1609
    %v1619 = vsub.f32 0.0, %v1615
    %v1620 = vsub.f32 0.0, %v1616
    %v1621 = vsub.f32 0.0, %v1617
    %v1622 = vsub.f32 0.0, %v1618
    %v1623 = vmul.f32 %v1619, 1.442695
    %v1624 = vpow.pop %v1623
    %v1625 = vmul.f32 %v1620, 1.442695
    %v1626 = vpow.pop %v1625
    %v1627 = vmul.f32 %v1621, 1.442695
    %v1628 = vpow.pop %v1627
    %v1629 = vmul.f32 %v1622, 1.442695
    %v1630 = vpow.pop %v1629
    %v1631 = vadd.f32 %v1624, 1.0
    %v1632 = vlog2.pop %v1631
    %v1633 = vmul.f32 %v1632, 0.6931472
    %v1634 = vmul.f32 -0.5, %v1624
    %v1635 = vadd.f32 %v1634, 1.0
    %v1636 = vmul.f32 %v1635, %v1624
    %v1637 = vand.u32 2147483647, %v1624
    %vm1638 = vcmp.lt.f32.partialorder %v1637, 0.0004427343
    %v1639 = vsel %vm1638, %v1636, %v1633
    %v1640 = vadd.f32 %v1626, 1.0
    %v1641 = vlog2.pop %v1640
    %v1642 = vmul.f32 %v1641, 0.6931472
    %v1643 = vmul.f32 -0.5, %v1626
    %v1644 = vadd.f32 %v1643, 1.0
    %v1645 = vmul.f32 %v1644, %v1626
    %v1646 = vand.u32 2147483647, %v1626
    %vm1647 = vcmp.lt.f32.partialorder %v1646, 0.0004427343
    %v1648 = vsel %vm1647, %v1645, %v1642
    %v1649 = vadd.f32 %v1628, 1.0
    %v1650 = vlog2.pop %v1649
    %v1651 = vmul.f32 %v1650, 0.6931472
    %v1652 = vmul.f32 -0.5, %v1628
    %v1653 = vadd.f32 %v1652, 1.0
    %v1654 = vmul.f32 %v1653, %v1628
    %v1655 = vand.u32 2147483647, %v1628
    %vm1656 = vcmp.lt.f32.partialorder %v1655, 0.0004427343
    %v1657 = vsel %vm1656, %v1654, %v1651
    %v1658 = vadd.f32 %v1630, 1.0
    %v1659 = vlog2.pop %v1658
    %v1660 = vmul.f32 %v1659, 0.6931472
    %v1661 = vmul.f32 -0.5, %v1630
    %v1662 = vadd.f32 %v1661, 1.0
    %v1663 = vmul.f32 %v1662, %v1630
    %v1664 = vand.u32 2147483647, %v1630
    %vm1665 = vcmp.lt.f32.partialorder %v1664, 0.0004427343
    %v1666 = vsel %vm1665, %v1663, %v1660
    %v1667 = vadd.f32 %v1611, %v1639
    %v1668 = vadd.f32 %v1612, %v1648
    %v1669 = vadd.f32 %v1613, %v1657
    %v1670 = vadd.f32 %v1614, %v1666
    %v1671 = vlaneseq
    %v1672 = vand.u32 %v1671, 127
    %vm1673 = vcmp.lt.s32.totalorder %v1672, 25
    %v1674 = vsel %vm1673, %v1600, %v1667
    %v1675 = vsel %vm1673, %v1603, %v1668
    %v1676 = vsel %vm1673, %v1606, %v1669
    %v1677 = vsel %vm1673, %v1609, %v1670
    %vm1678 = vcmask 408576
    %1679 = vst.msk [vmem:[#allocation2] sm:$0xff] %vm1678, %v1674
    %1680 = vst.msk [vmem:[#allocation2 + $0x8] sm:$0xff] %vm1678, %v1675
    %1681 = vst.msk [vmem:[#allocation2 + $0x10] sm:$0xff] %vm1678, %v1676
    %1682 = vst.msk [vmem:[#allocation2 + $0x18] sm:$0xff] %vm1678, %v1677
    // Predicated region
    $region26: #{tpu_custom_call.1} parent=1 // pred_check
      _
    $region27: #{tpu_custom_call.1} parent=1 // pred_check_branch
      %1684 = sbr.rel (0) target = $region29
    $region28: #{tpu_custom_call.1} parent=1 // pred_region
      %1686 = vsyncadd [#allocation3], 0
      %s1687 = sshll.u32 [#allocation2], 4
      %s1688 = int_to_ptr.vmem [resolvable:$true] %s1687
      %s1689 = sshll.u32 %s6, 4
      %s1690 = int_to_ptr.hbm [resolvable:$true] %s1689
      %1695 = dma.vmem_to_hbm [thread:$0]  %s1688, 512, %s1690, [#allocation3], 128, 128, 8
    $region29: #{tpu_custom_call.1} parent=1 // pred_fallthru
      _
    // Predicated region
    $region30: #{tpu_custom_call.1} parent=1 // pred_check
      _
    $region31: #{tpu_custom_call.1} parent=1 // pred_check_branch
      %1697 = sbr.rel (0) target = $region33
    $region32: #{tpu_custom_call.1} parent=1 // pred_region
      %1699 = dma.done [#allocation3], 512
    $region33: #{tpu_custom_call.1} parent=1 // pred_fallthru
      _
    %1700 = vsyncpa [#allocation3], 1

</llo_original>
